<compile_context>
chip_gen: v7x
topology: tpu7x:2x2x1
jax: 0.10.0
libtpu: 0.0.40
codegen_flags: <defaults>
</compile_context>

<pallas_src>
import functools

import jax
import jax.numpy as jnp
from jax import lax
from jax.experimental import pallas as pl
from jax.experimental.pallas import tpu as pltpu


def _make_kernel(kH, kW, dilation, TH, W_out, C, OC, fuse_taps, unroll):
    """One grid step = one (sample, row-tile)."""
    d = dilation
    KC = kH * kW * C

    if fuse_taps:
        # Small-C path: im2col the taps into VMEM so the MXU contraction depth
        # is K = kH*kW*C instead of just C.
        def kernel(x_ref, w_ref, b_ref, o_ref, patch_ref):
            # x_ref     : (H, C, W)        compute dtype — whole sample (resident)
            # w_ref     : (OC, KC)         compute dtype — (kh, kw, c)-flattened
            # b_ref     : (OC, 1)          f32
            # o_ref     : (TH, OC, W_out)  out dtype — W_out (spatial) is the lane dim
            # patch_ref : (TH, KC, W_out)  compute dtype — per-row im2col patches
            h0 = pl.program_id(1) * TH
            if TH % 8 == 0:
                h0 = pl.multiple_of(h0, 8)

            # im2col: ONE rectangular slab copy per (kh, kw) tap — kH*kW stores
            # total, read straight from x_ref, lane offset 0 in the scratch.
            for kh in range(kH):
                for kw in range(kW):
                    tap = kh * kW + kw
                    patch_ref[:, tap * C:(tap + 1) * C, :] = (
                        x_ref[pl.ds(h0 + kh * d, TH), :, kw * d:kw * d + W_out])

            w_all = w_ref[...]        # (OC, KC) — hoisted, reused for all rows
            bias = b_ref[...]         # (OC, 1)  f32

            def row(th, carry):
                # Transposed matmul: N = W_out (lane-dense spatial), K = KC.
                acc = jnp.dot(w_all, patch_ref[th],
                              preferred_element_type=jnp.float32)   # (OC, W_out)
                o_ref[th] = (acc + bias).astype(o_ref.dtype)
                return carry

            lax.fori_loop(0, TH, row, 0, unroll=unroll)

        return kernel

    # Large-C path: K = C already fills the MXU depth, so drop the im2col
    # scratch and accumulate kH*kW per-tap matmuls in an f32 accumulator.
    def kernel(x_ref, w_ref, b_ref, o_ref):
        h0 = pl.program_id(1) * TH
        if TH % 8 == 0:
            h0 = pl.multiple_of(h0, 8)
        bias = b_ref[...]             # (OC, 1) f32

        def row(th, carry):
            acc = jnp.zeros((OC, W_out), jnp.float32)
            for kh in range(kH):
                for kw in range(kW):
                    tap = kh * kW + kw
                    xt = x_ref[pl.ds(h0 + th + kh * d, 1), :,
                               kw * d:kw * d + W_out][0]            # (C, W_out)
                    wt = w_ref[:, tap * C:(tap + 1) * C]            # (OC, C)
                    acc = acc + jnp.dot(wt, xt,
                                        preferred_element_type=jnp.float32)
            o_ref[th] = (acc + bias).astype(o_ref.dtype)
            return carry

        lax.fori_loop(0, TH, row, 0, unroll=unroll)

    return kernel


def _vmem_need_bytes(TH, *, H, W, C, OC, KC, W_out, isz_c, isz_o, fuse_taps):
    x_blk = H * C * W * isz_c
    w_blk = OC * KC * isz_c
    b_blk = OC * 4
    o_blk = TH * OC * W_out * isz_o
    scratch = TH * KC * W_out * isz_c if fuse_taps else 0
    # Pipelined inputs/outputs are double-buffered; the scratch is single.
    return 2 * (x_blk + w_blk + b_blk + o_blk) + scratch


def adap_cnn_forward(x, weight, bias, *, out_channels, kernel_size,
                     stride=1, dilation=1, row_tile=None,
                     compute_dtype=jnp.bfloat16, fuse_taps=None):
    """Pallas implementation of AdapCNN.forward.

    x      : (B, C, H, W)  float32
    weight : (B*OC, C, 1, kH, kW)
    bias   : (B*OC,)
    returns: (1, B*OC, 1, H_out, W_out)   (same as the PyTorch module)
    """
    B, C, H, W = x.shape
    OC = out_channels
    kH = kW = kernel_size
    # TODO(synk): only stride=1 (the module default) is implemented in the kernel.
    assert stride == 1, "stride != 1 not implemented"
    H_out = H - (kH - 1) * dilation
    W_out = W - (kW - 1) * dilation
    assert H_out > 0 and W_out > 0

    KC = kH * kW * C
    out_dtype = x.dtype
    isz_c = jnp.dtype(compute_dtype).itemsize
    isz_o = jnp.dtype(out_dtype).itemsize

    if fuse_taps is None:
        # Small C: fuse taps via im2col (K = kH*kW*C).  Large C: C alone fills
        # the MXU contraction depth, so skip the scratch and its VMEM/vst cost.
        fuse_taps = (C < 128) and (kH * kW > 1)

    # Generation-aware VMEM budget (v5e/v6e: 128 MiB physical, v7x: 64 MiB).
    try:
        vmem_cap = int(pltpu.get_tpu_info().vmem_capacity_bytes)
    except Exception:
        vmem_cap = 64 << 20          # conservative fallback

    need = functools.partial(_vmem_need_bytes, H=H, W=W, C=C, OC=OC, KC=KC,
                             W_out=W_out, isz_c=isz_c, isz_o=isz_o,
                             fuse_taps=fuse_taps)

    if row_tile is None:
        # Largest divisor of H_out (capped at 64 rows) whose working set fits
        # ~80% of VMEM; degrades gracefully down to one row per step.
        budget = int(0.80 * vmem_cap) - (4 << 20)
        row_tile = 1
        for t in range(min(H_out, 64), 0, -1):
            if H_out % t == 0 and need(t) <= budget:
                row_tile = t
                break
    TH = row_tile
    assert H_out % TH == 0, (TH, H_out)
    n_ht = H_out // TH

    # ---- layout plumbing (pure JAX glue) ----
    # x goes in as (B, H, C, W) so every conv tap is one rectangular slab;
    # weights are flattened to (B, OC, kH*kW*C) matching the im2col order.
    # TODO(synk): accept x/weights already in kernel layout (or use
    # CompilerParams(allow_input_fusion=...)) to avoid these extra HBM passes.
    x_l = jnp.transpose(x, (0, 2, 1, 3)).astype(compute_dtype)       # (B, H, C, W)
    w5 = weight[:, :, 0].reshape(B, OC, C, kH, kW)
    w_l = jnp.transpose(w5, (0, 1, 3, 4, 2)).reshape(B, OC, KC)      # (B, OC, KC)
    w_l = w_l.astype(compute_dtype)
    b_l = bias.astype(jnp.float32).reshape(B, OC, 1)

    unroll = bool(TH <= 32)
    kernel = _make_kernel(kH, kW, dilation, TH, W_out, C, OC, fuse_taps, unroll)

    flops = 2 * B * H_out * W_out * KC * OC
    bytes_accessed = (B * H * C * W * isz_c            # x
                      + B * OC * KC * isz_c            # weights
                      + B * OC * 4                     # bias
                      + B * H_out * OC * W_out * isz_o)  # out (no OC padding)

    # Explicit VMEM limit: what this config needs (+ headroom), capped at 90%
    # of physical VMEM (headroom for compiler-internal scratch on v7x) but NOT
    # hard-capped at 64 MiB on the 128 MiB parts.
    vmem_limit = int(min(max(need(TH) + (4 << 20), 32 << 20), 0.90 * vmem_cap))

    scratch_shapes = ([pltpu.VMEM((TH, KC, W_out), compute_dtype)]
                      if fuse_taps else [])

    out = pl.pallas_call(
        kernel,
        out_shape=jax.ShapeDtypeStruct((B, H_out, OC, W_out), out_dtype),
        grid=(B, n_ht),
        in_specs=[
            # Whole sample stays resident across its row tiles (block index is
            # unchanged between consecutive t steps, so it is not re-fetched).
            # TODO(synk): for very large images on v7x, switch this to an
            # overlapping TB-row band via memory_space=pl.ANY + make_async_copy.
            pl.BlockSpec((None, H, C, W), lambda b, t: (b, 0, 0, 0)),
            pl.BlockSpec((None, OC, KC), lambda b, t: (b, 0, 0)),
            pl.BlockSpec((None, OC, 1), lambda b, t: (b, 0, 0)),
        ],
        out_specs=pl.BlockSpec((None, TH, OC, W_out), lambda b, t: (b, t, 0, 0)),
        scratch_shapes=scratch_shapes,
        compiler_params=pltpu.CompilerParams(
            dimension_semantics=("parallel", "parallel"),
            vmem_limit_bytes=vmem_limit),
        cost_estimate=pl.CostEstimate(flops=flops, transcendentals=0,
                                      bytes_accessed=bytes_accessed),
    )(x_l, w_l, b_l)                                   # (B, H_out, OC, W_out)

    # Back to the PyTorch conv3d output convention: (1, B*OC, 1, H_out, W_out).
    out_pt = jnp.transpose(out, (0, 2, 1, 3)).reshape(1, B * OC, 1, H_out, W_out)
    return out_pt


def _reference(x, weight, bias, *, out_channels, dilation=1):
    """Pure-JAX reference mirroring F.conv3d(..., groups=B) with depth=1."""
    B, C, H, W = x.shape
    OC = out_channels
    w2d = weight[:, :, 0]                              # (B*OC, C, kH, kW)
    lhs = x.reshape(1, B * C, H, W)
    out = jax.lax.conv_general_dilated(
        lhs, w2d,
        window_strides=(1, 1),
        padding="VALID",
        rhs_dilation=(dilation, dilation),
        dimension_numbers=("NCHW", "OIHW", "NCHW"),
        feature_group_count=B,
    )
    out = out + bias[None, :, None, None]
    _, _, Ho, Wo = out.shape
    return out.reshape(1, B * OC, 1, Ho, Wo)


if __name__ == "__main__":
    B, C, OC, H, W, K = 2, 4, 8, 16, 16, 3
    key = jax.random.PRNGKey(0)
    k1, k2, k3 = jax.random.split(key, 3)
    x = jax.random.normal(k1, (B, C, H, W), dtype=jnp.float32)
    weight = jax.random.normal(k2, (B * OC, C, 1, K, K), dtype=jnp.float32) * 0.1
    bias = jax.random.normal(k3, (B * OC,), dtype=jnp.float32)

    # Default (bf16 MXU inputs, f32 accumulation) path: compare against a
    # reference whose inputs are quantized the same way; remaining difference
    # is only accumulation order.
    fwd = jax.jit(functools.partial(adap_cnn_forward,
                                    out_channels=OC, kernel_size=K))
    out = jax.block_until_ready(fwd(x, weight, bias))
    xq = x.astype(jnp.bfloat16).astype(jnp.float32)
    wq = weight.astype(jnp.bfloat16).astype(jnp.float32)
    ref = _reference(xq, wq, bias, out_channels=OC)
    assert out.shape == ref.shape, (out.shape, ref.shape)
    err = float(jnp.max(jnp.abs(out - ref)))
    assert jnp.allclose(out, ref, atol=2e-3, rtol=2e-3), err

    # Validated float32 fallback path (per review).  Tolerance is loose because
    # XLA's reference f32 conv (and the MXU) may internally use bf16 passes.
    fwd32 = jax.jit(functools.partial(adap_cnn_forward, out_channels=OC,
                                      kernel_size=K,
                                      compute_dtype=jnp.float32))
    out32 = jax.block_until_ready(fwd32(x, weight, bias))
    ref32 = _reference(x, weight, bias, out_channels=OC)
    err32 = float(jnp.max(jnp.abs(out32 - ref32)))
    assert jnp.allclose(out32, ref32, atol=3e-2, rtol=3e-2), err32

    print("KERNEL_OK")
</pallas_src>

<mosaic_0001>
module attributes {stable_mosaic.version = 11 : i64} {
  func.func @kernel(%arg0: i32, %arg1: i32, %arg2: memref<1x16x4x16xbf16, #tpu.memory_space<vmem>>, %arg3: memref<1x8x36xbf16, #tpu.memory_space<vmem>>, %arg4: memref<1x8x1xf32, #tpu.memory_space<vmem>>, %arg5: memref<1x14x8x14xf32, #tpu.memory_space<vmem>>, %arg6: memref<14x36x14xbf16, #tpu.memory_space<vmem>>) attributes {dimension_semantics = [#tpu.dimension_semantics<parallel>, #tpu.dimension_semantics<parallel>], iteration_bounds = array<i64: 2, 1>, scalar_prefetch = 0 : i64, scratch_operands = 1 : i64, tpu.core_type = #tpu.core_type<tc>, window_params = [{transform_indices = @transform_0, window_bounds = array<i64: 1, 16, 4, 16>}, {transform_indices = @transform_1, window_bounds = array<i64: 1, 8, 36>}, {transform_indices = @transform_2, window_bounds = array<i64: 1, 8, 1>}, {transform_indices = @transform_3, window_bounds = array<i64: 1, 14, 8, 14>}]} {
    %c14_i32 = arith.constant 14 : i32
    %0 = arith.muli %arg1, %c14_i32 : i32
    %c0_i32 = arith.constant 0 : i32
    %1 = arith.addi %0, %c0_i32 : i32
    %c0 = arith.constant 0 : index
    %2 = arith.index_cast %1 : i32 to index
    %c0_0 = arith.constant 0 : index
    %c0_1 = arith.constant 0 : index
    %3 = vector.load %arg2[%c0, %2, %c0_0, %c0_1] : memref<1x16x4x16xbf16, #tpu.memory_space<vmem>>, vector<1x14x4x14xbf16>
    %4 = vector.shape_cast %3 : vector<1x14x4x14xbf16> to vector<14x4x14xbf16>
    %c0_2 = arith.constant 0 : index
    %c0_3 = arith.constant 0 : index
    %c0_4 = arith.constant 0 : index
    %5 = vector.load %arg6[%c0_2, %c0_3, %c0_4] : memref<14x36x14xbf16, #tpu.memory_space<vmem>>, vector<14x4x14xbf16>
    tpu.vector_store %arg6[%c0_2, %c0_3, %c0_4], %4 {strides = array<i32>} : memref<14x36x14xbf16, #tpu.memory_space<vmem>>, vector<14x4x14xbf16>,
    %c0_i32_5 = arith.constant 0 : i32
    %6 = arith.addi %0, %c0_i32_5 : i32
    %c0_6 = arith.constant 0 : index
    %7 = arith.index_cast %6 : i32 to index
    %c0_7 = arith.constant 0 : index
    %c1 = arith.constant 1 : index
    %8 = vector.load %arg2[%c0_6, %7, %c0_7, %c1] : memref<1x16x4x16xbf16, #tpu.memory_space<vmem>>, vector<1x14x4x14xbf16>
    %9 = vector.shape_cast %8 : vector<1x14x4x14xbf16> to vector<14x4x14xbf16>
    %c0_8 = arith.constant 0 : index
    %c4 = arith.constant 4 : index
    %c0_9 = arith.constant 0 : index
    %10 = vector.load %arg6[%c0_8, %c4, %c0_9] : memref<14x36x14xbf16, #tpu.memory_space<vmem>>, vector<14x4x14xbf16>
    tpu.vector_store %arg6[%c0_8, %c4, %c0_9], %9 {strides = array<i32>} : memref<14x36x14xbf16, #tpu.memory_space<vmem>>, vector<14x4x14xbf16>,
    %c0_i32_10 = arith.constant 0 : i32
    %11 = arith.addi %0, %c0_i32_10 : i32
    %c0_11 = arith.constant 0 : index
    %12 = arith.index_cast %11 : i32 to index
    %c0_12 = arith.constant 0 : index
    %c2 = arith.constant 2 : index
    %13 = vector.load %arg2[%c0_11, %12, %c0_12, %c2] : memref<1x16x4x16xbf16, #tpu.memory_space<vmem>>, vector<1x14x4x14xbf16>
    %14 = vector.shape_cast %13 : vector<1x14x4x14xbf16> to vector<14x4x14xbf16>
    %c0_13 = arith.constant 0 : index
    %c8 = arith.constant 8 : index
    %c0_14 = arith.constant 0 : index
    %15 = vector.load %arg6[%c0_13, %c8, %c0_14] : memref<14x36x14xbf16, #tpu.memory_space<vmem>>, vector<14x4x14xbf16>
    tpu.vector_store %arg6[%c0_13, %c8, %c0_14], %14 {strides = array<i32>} : memref<14x36x14xbf16, #tpu.memory_space<vmem>>, vector<14x4x14xbf16>,
    %c1_i32 = arith.constant 1 : i32
    %16 = arith.addi %0, %c1_i32 : i32
    %c0_15 = arith.constant 0 : index
    %17 = arith.index_cast %16 : i32 to index
    %c0_16 = arith.constant 0 : index
    %c0_17 = arith.constant 0 : index
    %18 = vector.load %arg2[%c0_15, %17, %c0_16, %c0_17] : memref<1x16x4x16xbf16, #tpu.memory_space<vmem>>, vector<1x14x4x14xbf16>
    %19 = vector.shape_cast %18 : vector<1x14x4x14xbf16> to vector<14x4x14xbf16>
    %c0_18 = arith.constant 0 : index
    %c12 = arith.constant 12 : index
    %c0_19 = arith.constant 0 : index
    %20 = vector.load %arg6[%c0_18, %c12, %c0_19] : memref<14x36x14xbf16, #tpu.memory_space<vmem>>, vector<14x4x14xbf16>
    tpu.vector_store %arg6[%c0_18, %c12, %c0_19], %19 {strides = array<i32>} : memref<14x36x14xbf16, #tpu.memory_space<vmem>>, vector<14x4x14xbf16>,
    %c1_i32_20 = arith.constant 1 : i32
    %21 = arith.addi %0, %c1_i32_20 : i32
    %c0_21 = arith.constant 0 : index
    %22 = arith.index_cast %21 : i32 to index
    %c0_22 = arith.constant 0 : index
    %c1_23 = arith.constant 1 : index
    %23 = vector.load %arg2[%c0_21, %22, %c0_22, %c1_23] : memref<1x16x4x16xbf16, #tpu.memory_space<vmem>>, vector<1x14x4x14xbf16>
    %24 = vector.shape_cast %23 : vector<1x14x4x14xbf16> to vector<14x4x14xbf16>
    %c0_24 = arith.constant 0 : index
    %c16 = arith.constant 16 : index
    %c0_25 = arith.constant 0 : index
    %25 = vector.load %arg6[%c0_24, %c16, %c0_25] : memref<14x36x14xbf16, #tpu.memory_space<vmem>>, vector<14x4x14xbf16>
    tpu.vector_store %arg6[%c0_24, %c16, %c0_25], %24 {strides = array<i32>} : memref<14x36x14xbf16, #tpu.memory_space<vmem>>, vector<14x4x14xbf16>,
    %c1_i32_26 = arith.constant 1 : i32
    %26 = arith.addi %0, %c1_i32_26 : i32
    %c0_27 = arith.constant 0 : index
    %27 = arith.index_cast %26 : i32 to index
    %c0_28 = arith.constant 0 : index
    %c2_29 = arith.constant 2 : index
    %28 = vector.load %arg2[%c0_27, %27, %c0_28, %c2_29] : memref<1x16x4x16xbf16, #tpu.memory_space<vmem>>, vector<1x14x4x14xbf16>
    %29 = vector.shape_cast %28 : vector<1x14x4x14xbf16> to vector<14x4x14xbf16>
    %c0_30 = arith.constant 0 : index
    %c20 = arith.constant 20 : index
    %c0_31 = arith.constant 0 : index
    %30 = vector.load %arg6[%c0_30, %c20, %c0_31] : memref<14x36x14xbf16, #tpu.memory_space<vmem>>, vector<14x4x14xbf16>
    tpu.vector_store %arg6[%c0_30, %c20, %c0_31], %29 {strides = array<i32>} : memref<14x36x14xbf16, #tpu.memory_space<vmem>>, vector<14x4x14xbf16>,
    %c2_i32 = arith.constant 2 : i32
    %31 = arith.addi %0, %c2_i32 : i32
    %c0_32 = arith.constant 0 : index
    %32 = arith.index_cast %31 : i32 to index
    %c0_33 = arith.constant 0 : index
    %c0_34 = arith.constant 0 : index
    %33 = vector.load %arg2[%c0_32, %32, %c0_33, %c0_34] : memref<1x16x4x16xbf16, #tpu.memory_space<vmem>>, vector<1x14x4x14xbf16>
    %34 = vector.shape_cast %33 : vector<1x14x4x14xbf16> to vector<14x4x14xbf16>
    %c0_35 = arith.constant 0 : index
    %c24 = arith.constant 24 : index
    %c0_36 = arith.constant 0 : index
    %35 = vector.load %arg6[%c0_35, %c24, %c0_36] : memref<14x36x14xbf16, #tpu.memory_space<vmem>>, vector<14x4x14xbf16>
    tpu.vector_store %arg6[%c0_35, %c24, %c0_36], %34 {strides = array<i32>} : memref<14x36x14xbf16, #tpu.memory_space<vmem>>, vector<14x4x14xbf16>,
    %c2_i32_37 = arith.constant 2 : i32
    %36 = arith.addi %0, %c2_i32_37 : i32
    %c0_38 = arith.constant 0 : index
    %37 = arith.index_cast %36 : i32 to index
    %c0_39 = arith.constant 0 : index
    %c1_40 = arith.constant 1 : index
    %38 = vector.load %arg2[%c0_38, %37, %c0_39, %c1_40] : memref<1x16x4x16xbf16, #tpu.memory_space<vmem>>, vector<1x14x4x14xbf16>
    %39 = vector.shape_cast %38 : vector<1x14x4x14xbf16> to vector<14x4x14xbf16>
    %c0_41 = arith.constant 0 : index
    %c28 = arith.constant 28 : index
    %c0_42 = arith.constant 0 : index
    %40 = vector.load %arg6[%c0_41, %c28, %c0_42] : memref<14x36x14xbf16, #tpu.memory_space<vmem>>, vector<14x4x14xbf16>
    tpu.vector_store %arg6[%c0_41, %c28, %c0_42], %39 {strides = array<i32>} : memref<14x36x14xbf16, #tpu.memory_space<vmem>>, vector<14x4x14xbf16>,
    %c2_i32_43 = arith.constant 2 : i32
    %41 = arith.addi %0, %c2_i32_43 : i32
    %c0_44 = arith.constant 0 : index
    %42 = arith.index_cast %41 : i32 to index
    %c0_45 = arith.constant 0 : index
    %c2_46 = arith.constant 2 : index
    %43 = vector.load %arg2[%c0_44, %42, %c0_45, %c2_46] : memref<1x16x4x16xbf16, #tpu.memory_space<vmem>>, vector<1x14x4x14xbf16>
    %44 = vector.shape_cast %43 : vector<1x14x4x14xbf16> to vector<14x4x14xbf16>
    %c0_47 = arith.constant 0 : index
    %c32 = arith.constant 32 : index
    %c0_48 = arith.constant 0 : index
    %45 = vector.load %arg6[%c0_47, %c32, %c0_48] : memref<14x36x14xbf16, #tpu.memory_space<vmem>>, vector<14x4x14xbf16>
    tpu.vector_store %arg6[%c0_47, %c32, %c0_48], %44 {strides = array<i32>} : memref<14x36x14xbf16, #tpu.memory_space<vmem>>, vector<14x4x14xbf16>,
    %c0_49 = arith.constant 0 : index
    %c0_50 = arith.constant 0 : index
    %c0_51 = arith.constant 0 : index
    %46 = vector.load %arg3[%c0_49, %c0_50, %c0_51] : memref<1x8x36xbf16, #tpu.memory_space<vmem>>, vector<1x8x36xbf16>
    %47 = vector.shape_cast %46 : vector<1x8x36xbf16> to vector<8x36xbf16>
    %c0_52 = arith.constant 0 : index
    %c0_53 = arith.constant 0 : index
    %c0_54 = arith.constant 0 : index
    %48 = vector.load %arg4[%c0_52, %c0_53, %c0_54] : memref<1x8x1xf32, #tpu.memory_space<vmem>>, vector<1x8x1xf32>
    %49 = vector.shape_cast %48 : vector<1x8x1xf32> to vector<8x1xf32>
    %c0_i32_55 = arith.constant 0 : i32
    %50 = arith.index_cast %c0_i32_55 : i32 to index
    %c0_56 = arith.constant 0 : index
    %c0_57 = arith.constant 0 : index
    %51 = vector.load %arg6[%50, %c0_56, %c0_57] : memref<14x36x14xbf16, #tpu.memory_space<vmem>>, vector<1x36x14xbf16>
    %52 = vector.shape_cast %51 : vector<1x36x14xbf16> to vector<36x14xbf16>
    %cst = arith.constant dense<0.000000e+00> : vector<8x14xf32>
    %53 = tpu.matmul %47, %52, %cst {dimension_numbers = #tpu.dot_dimension_numbers<[1], [0], [0], [1], [0, 0, 1, 1], [], []>} : vector<8x36xbf16>, vector<36x14xbf16>, vector<8x14xf32> -> vector<8x14xf32>
    %54 = vector.broadcast %49 : vector<8x1xf32> to vector<8x14xf32>
    %55 = arith.addf %53, %54 : vector<8x14xf32>
    %c0_58 = arith.constant 0 : index
    %56 = arith.index_cast %c0_i32_55 : i32 to index
    %c0_59 = arith.constant 0 : index
    %c0_60 = arith.constant 0 : index
    %57 = vector.load %arg5[%c0_58, %56, %c0_59, %c0_60] : memref<1x14x8x14xf32, #tpu.memory_space<vmem>>, vector<1x1x8x14xf32>
    %58 = vector.shape_cast %57 : vector<1x1x8x14xf32> to vector<8x14xf32>
    %59 = vector.shape_cast %55 : vector<8x14xf32> to vector<1x1x8x14xf32>
    tpu.vector_store %arg5[%c0_58, %56, %c0_59, %c0_60], %59 {strides = array<i32>} : memref<1x14x8x14xf32, #tpu.memory_space<vmem>>, vector<1x1x8x14xf32>,
    %c1_i32_61 = arith.constant 1 : i32
    %60 = arith.index_cast %c1_i32_61 : i32 to index
    %c0_62 = arith.constant 0 : index
    %c0_63 = arith.constant 0 : index
    %61 = vector.load %arg6[%60, %c0_62, %c0_63] : memref<14x36x14xbf16, #tpu.memory_space<vmem>>, vector<1x36x14xbf16>
    %62 = vector.shape_cast %61 : vector<1x36x14xbf16> to vector<36x14xbf16>
    %cst_64 = arith.constant dense<0.000000e+00> : vector<8x14xf32>
    %63 = tpu.matmul %47, %62, %cst_64 {dimension_numbers = #tpu.dot_dimension_numbers<[1], [0], [0], [1], [0, 0, 1, 1], [], []>} : vector<8x36xbf16>, vector<36x14xbf16>, vector<8x14xf32> -> vector<8x14xf32>
    %64 = vector.broadcast %49 : vector<8x1xf32> to vector<8x14xf32>
    %65 = arith.addf %63, %64 : vector<8x14xf32>
    %c0_65 = arith.constant 0 : index
    %66 = arith.index_cast %c1_i32_61 : i32 to index
    %c0_66 = arith.constant 0 : index
    %c0_67 = arith.constant 0 : index
    %67 = vector.load %arg5[%c0_65, %66, %c0_66, %c0_67] : memref<1x14x8x14xf32, #tpu.memory_space<vmem>>, vector<1x1x8x14xf32>
    %68 = vector.shape_cast %67 : vector<1x1x8x14xf32> to vector<8x14xf32>
    %69 = vector.shape_cast %65 : vector<8x14xf32> to vector<1x1x8x14xf32>
    tpu.vector_store %arg5[%c0_65, %66, %c0_66, %c0_67], %69 {strides = array<i32>} : memref<1x14x8x14xf32, #tpu.memory_space<vmem>>, vector<1x1x8x14xf32>,
    %c2_i32_68 = arith.constant 2 : i32
    %70 = arith.index_cast %c2_i32_68 : i32 to index
    %c0_69 = arith.constant 0 : index
    %c0_70 = arith.constant 0 : index
    %71 = vector.load %arg6[%70, %c0_69, %c0_70] : memref<14x36x14xbf16, #tpu.memory_space<vmem>>, vector<1x36x14xbf16>
    %72 = vector.shape_cast %71 : vector<1x36x14xbf16> to vector<36x14xbf16>
    %cst_71 = arith.constant dense<0.000000e+00> : vector<8x14xf32>
    %73 = tpu.matmul %47, %72, %cst_71 {dimension_numbers = #tpu.dot_dimension_numbers<[1], [0], [0], [1], [0, 0, 1, 1], [], []>} : vector<8x36xbf16>, vector<36x14xbf16>, vector<8x14xf32> -> vector<8x14xf32>
    %74 = vector.broadcast %49 : vector<8x1xf32> to vector<8x14xf32>
    %75 = arith.addf %73, %74 : vector<8x14xf32>
    %c0_72 = arith.constant 0 : index
    %76 = arith.index_cast %c2_i32_68 : i32 to index
    %c0_73 = arith.constant 0 : index
    %c0_74 = arith.constant 0 : index
    %77 = vector.load %arg5[%c0_72, %76, %c0_73, %c0_74] : memref<1x14x8x14xf32, #tpu.memory_space<vmem>>, vector<1x1x8x14xf32>
    %78 = vector.shape_cast %77 : vector<1x1x8x14xf32> to vector<8x14xf32>
    %79 = vector.shape_cast %75 : vector<8x14xf32> to vector<1x1x8x14xf32>
    tpu.vector_store %arg5[%c0_72, %76, %c0_73, %c0_74], %79 {strides = array<i32>} : memref<1x14x8x14xf32, #tpu.memory_space<vmem>>, vector<1x1x8x14xf32>,
    %c3_i32 = arith.constant 3 : i32
    %80 = arith.index_cast %c3_i32 : i32 to index
    %c0_75 = arith.constant 0 : index
    %c0_76 = arith.constant 0 : index
    %81 = vector.load %arg6[%80, %c0_75, %c0_76] : memref<14x36x14xbf16, #tpu.memory_space<vmem>>, vector<1x36x14xbf16>
    %82 = vector.shape_cast %81 : vector<1x36x14xbf16> to vector<36x14xbf16>
    %cst_77 = arith.constant dense<0.000000e+00> : vector<8x14xf32>
    %83 = tpu.matmul %47, %82, %cst_77 {dimension_numbers = #tpu.dot_dimension_numbers<[1], [0], [0], [1], [0, 0, 1, 1], [], []>} : vector<8x36xbf16>, vector<36x14xbf16>, vector<8x14xf32> -> vector<8x14xf32>
    %84 = vector.broadcast %49 : vector<8x1xf32> to vector<8x14xf32>
    %85 = arith.addf %83, %84 : vector<8x14xf32>
    %c0_78 = arith.constant 0 : index
    %86 = arith.index_cast %c3_i32 : i32 to index
    %c0_79 = arith.constant 0 : index
    %c0_80 = arith.constant 0 : index
    %87 = vector.load %arg5[%c0_78, %86, %c0_79, %c0_80] : memref<1x14x8x14xf32, #tpu.memory_space<vmem>>, vector<1x1x8x14xf32>
    %88 = vector.shape_cast %87 : vector<1x1x8x14xf32> to vector<8x14xf32>
    %89 = vector.shape_cast %85 : vector<8x14xf32> to vector<1x1x8x14xf32>
    tpu.vector_store %arg5[%c0_78, %86, %c0_79, %c0_80], %89 {strides = array<i32>} : memref<1x14x8x14xf32, #tpu.memory_space<vmem>>, vector<1x1x8x14xf32>,
    %c4_i32 = arith.constant 4 : i32
    %90 = arith.index_cast %c4_i32 : i32 to index
    %c0_81 = arith.constant 0 : index
    %c0_82 = arith.constant 0 : index
    %91 = vector.load %arg6[%90, %c0_81, %c0_82] : memref<14x36x14xbf16, #tpu.memory_space<vmem>>, vector<1x36x14xbf16>
    %92 = vector.shape_cast %91 : vector<1x36x14xbf16> to vector<36x14xbf16>
    %cst_83 = arith.constant dense<0.000000e+00> : vector<8x14xf32>
    %93 = tpu.matmul %47, %92, %cst_83 {dimension_numbers = #tpu.dot_dimension_numbers<[1], [0], [0], [1], [0, 0, 1, 1], [], []>} : vector<8x36xbf16>, vector<36x14xbf16>, vector<8x14xf32> -> vector<8x14xf32>
    %94 = vector.broadcast %49 : vector<8x1xf32> to vector<8x14xf32>
    %95 = arith.addf %93, %94 : vector<8x14xf32>
    %c0_84 = arith.constant 0 : index
    %96 = arith.index_cast %c4_i32 : i32 to index
    %c0_85 = arith.constant 0 : index
    %c0_86 = arith.constant 0 : index
    %97 = vector.load %arg5[%c0_84, %96, %c0_85, %c0_86] : memref<1x14x8x14xf32, #tpu.memory_space<vmem>>, vector<1x1x8x14xf32>
    %98 = vector.shape_cast %97 : vector<1x1x8x14xf32> to vector<8x14xf32>
    %99 = vector.shape_cast %95 : vector<8x14xf32> to vector<1x1x8x14xf32>
    tpu.vector_store %arg5[%c0_84, %96, %c0_85, %c0_86], %99 {strides = array<i32>} : memref<1x14x8x14xf32, #tpu.memory_space<vmem>>, vector<1x1x8x14xf32>,
    %c5_i32 = arith.constant 5 : i32
    %100 = arith.index_cast %c5_i32 : i32 to index
    %c0_87 = arith.constant 0 : index
    %c0_88 = arith.constant 0 : index
    %101 = vector.load %arg6[%100, %c0_87, %c0_88] : memref<14x36x14xbf16, #tpu.memory_space<vmem>>, vector<1x36x14xbf16>
    %102 = vector.shape_cast %101 : vector<1x36x14xbf16> to vector<36x14xbf16>
    %cst_89 = arith.constant dense<0.000000e+00> : vector<8x14xf32>
    %103 = tpu.matmul %47, %102, %cst_89 {dimension_numbers = #tpu.dot_dimension_numbers<[1], [0], [0], [1], [0, 0, 1, 1], [], []>} : vector<8x36xbf16>, vector<36x14xbf16>, vector<8x14xf32> -> vector<8x14xf32>
    %104 = vector.broadcast %49 : vector<8x1xf32> to vector<8x14xf32>
    %105 = arith.addf %103, %104 : vector<8x14xf32>
    %c0_90 = arith.constant 0 : index
    %106 = arith.index_cast %c5_i32 : i32 to index
    %c0_91 = arith.constant 0 : index
    %c0_92 = arith.constant 0 : index
    %107 = vector.load %arg5[%c0_90, %106, %c0_91, %c0_92] : memref<1x14x8x14xf32, #tpu.memory_space<vmem>>, vector<1x1x8x14xf32>
    %108 = vector.shape_cast %107 : vector<1x1x8x14xf32> to vector<8x14xf32>
    %109 = vector.shape_cast %105 : vector<8x14xf32> to vector<1x1x8x14xf32>
    tpu.vector_store %arg5[%c0_90, %106, %c0_91, %c0_92], %109 {strides = array<i32>} : memref<1x14x8x14xf32, #tpu.memory_space<vmem>>, vector<1x1x8x14xf32>,
    %c6_i32 = arith.constant 6 : i32
    %110 = arith.index_cast %c6_i32 : i32 to index
    %c0_93 = arith.constant 0 : index
    %c0_94 = arith.constant 0 : index
    %111 = vector.load %arg6[%110, %c0_93, %c0_94] : memref<14x36x14xbf16, #tpu.memory_space<vmem>>, vector<1x36x14xbf16>
    %112 = vector.shape_cast %111 : vector<1x36x14xbf16> to vector<36x14xbf16>
    %cst_95 = arith.constant dense<0.000000e+00> : vector<8x14xf32>
    %113 = tpu.matmul %47, %112, %cst_95 {dimension_numbers = #tpu.dot_dimension_numbers<[1], [0], [0], [1], [0, 0, 1, 1], [], []>} : vector<8x36xbf16>, vector<36x14xbf16>, vector<8x14xf32> -> vector<8x14xf32>
    %114 = vector.broadcast %49 : vector<8x1xf32> to vector<8x14xf32>
    %115 = arith.addf %113, %114 : vector<8x14xf32>
    %c0_96 = arith.constant 0 : index
    %116 = arith.index_cast %c6_i32 : i32 to index
    %c0_97 = arith.constant 0 : index
    %c0_98 = arith.constant 0 : index
    %117 = vector.load %arg5[%c0_96, %116, %c0_97, %c0_98] : memref<1x14x8x14xf32, #tpu.memory_space<vmem>>, vector<1x1x8x14xf32>
    %118 = vector.shape_cast %117 : vector<1x1x8x14xf32> to vector<8x14xf32>
    %119 = vector.shape_cast %115 : vector<8x14xf32> to vector<1x1x8x14xf32>
    tpu.vector_store %arg5[%c0_96, %116, %c0_97, %c0_98], %119 {strides = array<i32>} : memref<1x14x8x14xf32, #tpu.memory_space<vmem>>, vector<1x1x8x14xf32>,
    %c7_i32 = arith.constant 7 : i32
    %120 = arith.index_cast %c7_i32 : i32 to index
    %c0_99 = arith.constant 0 : index
    %c0_100 = arith.constant 0 : index
    %121 = vector.load %arg6[%120, %c0_99, %c0_100] : memref<14x36x14xbf16, #tpu.memory_space<vmem>>, vector<1x36x14xbf16>
    %122 = vector.shape_cast %121 : vector<1x36x14xbf16> to vector<36x14xbf16>
    %cst_101 = arith.constant dense<0.000000e+00> : vector<8x14xf32>
    %123 = tpu.matmul %47, %122, %cst_101 {dimension_numbers = #tpu.dot_dimension_numbers<[1], [0], [0], [1], [0, 0, 1, 1], [], []>} : vector<8x36xbf16>, vector<36x14xbf16>, vector<8x14xf32> -> vector<8x14xf32>
    %124 = vector.broadcast %49 : vector<8x1xf32> to vector<8x14xf32>
    %125 = arith.addf %123, %124 : vector<8x14xf32>
    %c0_102 = arith.constant 0 : index
    %126 = arith.index_cast %c7_i32 : i32 to index
    %c0_103 = arith.constant 0 : index
    %c0_104 = arith.constant 0 : index
    %127 = vector.load %arg5[%c0_102, %126, %c0_103, %c0_104] : memref<1x14x8x14xf32, #tpu.memory_space<vmem>>, vector<1x1x8x14xf32>
    %128 = vector.shape_cast %127 : vector<1x1x8x14xf32> to vector<8x14xf32>
    %129 = vector.shape_cast %125 : vector<8x14xf32> to vector<1x1x8x14xf32>
    tpu.vector_store %arg5[%c0_102, %126, %c0_103, %c0_104], %129 {strides = array<i32>} : memref<1x14x8x14xf32, #tpu.memory_space<vmem>>, vector<1x1x8x14xf32>,
    %c8_i32 = arith.constant 8 : i32
    %130 = arith.index_cast %c8_i32 : i32 to index
    %c0_105 = arith.constant 0 : index
    %c0_106 = arith.constant 0 : index
    %131 = vector.load %arg6[%130, %c0_105, %c0_106] : memref<14x36x14xbf16, #tpu.memory_space<vmem>>, vector<1x36x14xbf16>
    %132 = vector.shape_cast %131 : vector<1x36x14xbf16> to vector<36x14xbf16>
    %cst_107 = arith.constant dense<0.000000e+00> : vector<8x14xf32>
    %133 = tpu.matmul %47, %132, %cst_107 {dimension_numbers = #tpu.dot_dimension_numbers<[1], [0], [0], [1], [0, 0, 1, 1], [], []>} : vector<8x36xbf16>, vector<36x14xbf16>, vector<8x14xf32> -> vector<8x14xf32>
    %134 = vector.broadcast %49 : vector<8x1xf32> to vector<8x14xf32>
    %135 = arith.addf %133, %134 : vector<8x14xf32>
    %c0_108 = arith.constant 0 : index
    %136 = arith.index_cast %c8_i32 : i32 to index
    %c0_109 = arith.constant 0 : index
    %c0_110 = arith.constant 0 : index
    %137 = vector.load %arg5[%c0_108, %136, %c0_109, %c0_110] : memref<1x14x8x14xf32, #tpu.memory_space<vmem>>, vector<1x1x8x14xf32>
    %138 = vector.shape_cast %137 : vector<1x1x8x14xf32> to vector<8x14xf32>
    %139 = vector.shape_cast %135 : vector<8x14xf32> to vector<1x1x8x14xf32>
    tpu.vector_store %arg5[%c0_108, %136, %c0_109, %c0_110], %139 {strides = array<i32>} : memref<1x14x8x14xf32, #tpu.memory_space<vmem>>, vector<1x1x8x14xf32>,
    %c9_i32 = arith.constant 9 : i32
    %140 = arith.index_cast %c9_i32 : i32 to index
    %c0_111 = arith.constant 0 : index
    %c0_112 = arith.constant 0 : index
    %141 = vector.load %arg6[%140, %c0_111, %c0_112] : memref<14x36x14xbf16, #tpu.memory_space<vmem>>, vector<1x36x14xbf16>
    %142 = vector.shape_cast %141 : vector<1x36x14xbf16> to vector<36x14xbf16>
    %cst_113 = arith.constant dense<0.000000e+00> : vector<8x14xf32>
    %143 = tpu.matmul %47, %142, %cst_113 {dimension_numbers = #tpu.dot_dimension_numbers<[1], [0], [0], [1], [0, 0, 1, 1], [], []>} : vector<8x36xbf16>, vector<36x14xbf16>, vector<8x14xf32> -> vector<8x14xf32>
    %144 = vector.broadcast %49 : vector<8x1xf32> to vector<8x14xf32>
    %145 = arith.addf %143, %144 : vector<8x14xf32>
    %c0_114 = arith.constant 0 : index
    %146 = arith.index_cast %c9_i32 : i32 to index
    %c0_115 = arith.constant 0 : index
    %c0_116 = arith.constant 0 : index
    %147 = vector.load %arg5[%c0_114, %146, %c0_115, %c0_116] : memref<1x14x8x14xf32, #tpu.memory_space<vmem>>, vector<1x1x8x14xf32>
    %148 = vector.shape_cast %147 : vector<1x1x8x14xf32> to vector<8x14xf32>
    %149 = vector.shape_cast %145 : vector<8x14xf32> to vector<1x1x8x14xf32>
    tpu.vector_store %arg5[%c0_114, %146, %c0_115, %c0_116], %149 {strides = array<i32>} : memref<1x14x8x14xf32, #tpu.memory_space<vmem>>, vector<1x1x8x14xf32>,
    %c10_i32 = arith.constant 10 : i32
    %150 = arith.index_cast %c10_i32 : i32 to index
    %c0_117 = arith.constant 0 : index
    %c0_118 = arith.constant 0 : index
    %151 = vector.load %arg6[%150, %c0_117, %c0_118] : memref<14x36x14xbf16, #tpu.memory_space<vmem>>, vector<1x36x14xbf16>
    %152 = vector.shape_cast %151 : vector<1x36x14xbf16> to vector<36x14xbf16>
    %cst_119 = arith.constant dense<0.000000e+00> : vector<8x14xf32>
    %153 = tpu.matmul %47, %152, %cst_119 {dimension_numbers = #tpu.dot_dimension_numbers<[1], [0], [0], [1], [0, 0, 1, 1], [], []>} : vector<8x36xbf16>, vector<36x14xbf16>, vector<8x14xf32> -> vector<8x14xf32>
    %154 = vector.broadcast %49 : vector<8x1xf32> to vector<8x14xf32>
    %155 = arith.addf %153, %154 : vector<8x14xf32>
    %c0_120 = arith.constant 0 : index
    %156 = arith.index_cast %c10_i32 : i32 to index
    %c0_121 = arith.constant 0 : index
    %c0_122 = arith.constant 0 : index
    %157 = vector.load %arg5[%c0_120, %156, %c0_121, %c0_122] : memref<1x14x8x14xf32, #tpu.memory_space<vmem>>, vector<1x1x8x14xf32>
    %158 = vector.shape_cast %157 : vector<1x1x8x14xf32> to vector<8x14xf32>
    %159 = vector.shape_cast %155 : vector<8x14xf32> to vector<1x1x8x14xf32>
    tpu.vector_store %arg5[%c0_120, %156, %c0_121, %c0_122], %159 {strides = array<i32>} : memref<1x14x8x14xf32, #tpu.memory_space<vmem>>, vector<1x1x8x14xf32>,
    %c11_i32 = arith.constant 11 : i32
    %160 = arith.index_cast %c11_i32 : i32 to index
    %c0_123 = arith.constant 0 : index
    %c0_124 = arith.constant 0 : index
    %161 = vector.load %arg6[%160, %c0_123, %c0_124] : memref<14x36x14xbf16, #tpu.memory_space<vmem>>, vector<1x36x14xbf16>
    %162 = vector.shape_cast %161 : vector<1x36x14xbf16> to vector<36x14xbf16>
    %cst_125 = arith.constant dense<0.000000e+00> : vector<8x14xf32>
    %163 = tpu.matmul %47, %162, %cst_125 {dimension_numbers = #tpu.dot_dimension_numbers<[1], [0], [0], [1], [0, 0, 1, 1], [], []>} : vector<8x36xbf16>, vector<36x14xbf16>, vector<8x14xf32> -> vector<8x14xf32>
    %164 = vector.broadcast %49 : vector<8x1xf32> to vector<8x14xf32>
    %165 = arith.addf %163, %164 : vector<8x14xf32>
    %c0_126 = arith.constant 0 : index
    %166 = arith.index_cast %c11_i32 : i32 to index
    %c0_127 = arith.constant 0 : index
    %c0_128 = arith.constant 0 : index
    %167 = vector.load %arg5[%c0_126, %166, %c0_127, %c0_128] : memref<1x14x8x14xf32, #tpu.memory_space<vmem>>, vector<1x1x8x14xf32>
    %168 = vector.shape_cast %167 : vector<1x1x8x14xf32> to vector<8x14xf32>
    %169 = vector.shape_cast %165 : vector<8x14xf32> to vector<1x1x8x14xf32>
    tpu.vector_store %arg5[%c0_126, %166, %c0_127, %c0_128], %169 {strides = array<i32>} : memref<1x14x8x14xf32, #tpu.memory_space<vmem>>, vector<1x1x8x14xf32>,
    %c12_i32 = arith.constant 12 : i32
    %170 = arith.index_cast %c12_i32 : i32 to index
    %c0_129 = arith.constant 0 : index
    %c0_130 = arith.constant 0 : index
    %171 = vector.load %arg6[%170, %c0_129, %c0_130] : memref<14x36x14xbf16, #tpu.memory_space<vmem>>, vector<1x36x14xbf16>
    %172 = vector.shape_cast %171 : vector<1x36x14xbf16> to vector<36x14xbf16>
    %cst_131 = arith.constant dense<0.000000e+00> : vector<8x14xf32>
    %173 = tpu.matmul %47, %172, %cst_131 {dimension_numbers = #tpu.dot_dimension_numbers<[1], [0], [0], [1], [0, 0, 1, 1], [], []>} : vector<8x36xbf16>, vector<36x14xbf16>, vector<8x14xf32> -> vector<8x14xf32>
    %174 = vector.broadcast %49 : vector<8x1xf32> to vector<8x14xf32>
    %175 = arith.addf %173, %174 : vector<8x14xf32>
    %c0_132 = arith.constant 0 : index
    %176 = arith.index_cast %c12_i32 : i32 to index
    %c0_133 = arith.constant 0 : index
    %c0_134 = arith.constant 0 : index
    %177 = vector.load %arg5[%c0_132, %176, %c0_133, %c0_134] : memref<1x14x8x14xf32, #tpu.memory_space<vmem>>, vector<1x1x8x14xf32>
    %178 = vector.shape_cast %177 : vector<1x1x8x14xf32> to vector<8x14xf32>
    %179 = vector.shape_cast %175 : vector<8x14xf32> to vector<1x1x8x14xf32>
    tpu.vector_store %arg5[%c0_132, %176, %c0_133, %c0_134], %179 {strides = array<i32>} : memref<1x14x8x14xf32, #tpu.memory_space<vmem>>, vector<1x1x8x14xf32>,
    %c13_i32 = arith.constant 13 : i32
    %180 = arith.index_cast %c13_i32 : i32 to index
    %c0_135 = arith.constant 0 : index
    %c0_136 = arith.constant 0 : index
    %181 = vector.load %arg6[%180, %c0_135, %c0_136] : memref<14x36x14xbf16, #tpu.memory_space<vmem>>, vector<1x36x14xbf16>
    %182 = vector.shape_cast %181 : vector<1x36x14xbf16> to vector<36x14xbf16>
    %cst_137 = arith.constant dense<0.000000e+00> : vector<8x14xf32>
    %183 = tpu.matmul %47, %182, %cst_137 {dimension_numbers = #tpu.dot_dimension_numbers<[1], [0], [0], [1], [0, 0, 1, 1], [], []>} : vector<8x36xbf16>, vector<36x14xbf16>, vector<8x14xf32> -> vector<8x14xf32>
    %184 = vector.broadcast %49 : vector<8x1xf32> to vector<8x14xf32>
    %185 = arith.addf %183, %184 : vector<8x14xf32>
    %c0_138 = arith.constant 0 : index
    %186 = arith.index_cast %c13_i32 : i32 to index
    %c0_139 = arith.constant 0 : index
    %c0_140 = arith.constant 0 : index
    %187 = vector.load %arg5[%c0_138, %186, %c0_139, %c0_140] : memref<1x14x8x14xf32, #tpu.memory_space<vmem>>, vector<1x1x8x14xf32>
    %188 = vector.shape_cast %187 : vector<1x1x8x14xf32> to vector<8x14xf32>
    %189 = vector.shape_cast %185 : vector<8x14xf32> to vector<1x1x8x14xf32>
    tpu.vector_store %arg5[%c0_138, %186, %c0_139, %c0_140], %189 {strides = array<i32>} : memref<1x14x8x14xf32, #tpu.memory_space<vmem>>, vector<1x1x8x14xf32>,
    %c14_i32_141 = arith.constant 14 : i32
    return
  }
  func.func @transform_0(%arg0: i32, %arg1: i32) -> (i32, i32, i32, i32) {
    %c0_i32 = arith.constant 0 : i32
    %c0_i32_0 = arith.constant 0 : i32
    %c0_i32_1 = arith.constant 0 : i32
    %c0_i32_2 = arith.constant 0 : i32
    return %arg0, %c0_i32, %c0_i32_0, %c0_i32_1 : i32, i32, i32, i32
  }
  func.func @transform_1(%arg0: i32, %arg1: i32) -> (i32, i32, i32) {
    %c0_i32 = arith.constant 0 : i32
    %c0_i32_0 = arith.constant 0 : i32
    %c0_i32_1 = arith.constant 0 : i32
    return %arg0, %c0_i32, %c0_i32_0 : i32, i32, i32
  }
  func.func @transform_2(%arg0: i32, %arg1: i32) -> (i32, i32, i32) {
    %c0_i32 = arith.constant 0 : i32
    %c0_i32_0 = arith.constant 0 : i32
    %c0_i32_1 = arith.constant 0 : i32
    return %arg0, %c0_i32, %c0_i32_0 : i32, i32, i32
  }
  func.func @transform_3(%arg0: i32, %arg1: i32) -> (i32, i32, i32, i32) {
    %c0_i32 = arith.constant 0 : i32
    %c0_i32_0 = arith.constant 0 : i32
    %c0_i32_1 = arith.constant 0 : i32
    return %arg0, %arg1, %c0_i32, %c0_i32_0 : i32, i32, i32, i32
  }
}

</mosaic_0001>

<llo_original>
// kernel: adap_cnn_forward.1
$region0: #{adap_cnn_forward.1}
  #allocation0 [shape = 'u32[]', space=smem, size = 0x4, offset = 0x4, fixed_abs, tag = 'smem constant byte address 0x4 - core index']
  #allocation1 [shape = 'u32[144,128]{1,0:T(1,128)}', space=vmem, size = 0x12000, scoped, tag = 'internal scratch']
  #allocation2 [shape = 'bf16[14,36,14]{2,1,0:T(8,128)(2,1)}', space=vmem, size = 0x23000, scoped, tag = 'scratch operand']
  %s0 = inlined_call_operand.vmem [shape: bf16[2,16,4,16], index: 0, kind: input, shape index: {}]
  %s1 = inlined_call_operand.vmem [shape: bf16[2,8,36], index: 1, kind: input, shape index: {}]
  %s2 = inlined_call_operand.vmem [shape: f32[2,8,1], index: 2, kind: input, shape index: {}]
  %s3 = inlined_call_operand.vmem [shape: f32[2,14,8,14], index: 3, kind: output, shape index: {}]
  %s4 = sld [smem:[#allocation0]]
  $region45: #{adap_cnn_forward.1} parent=0
    _
  %s6 = ssub.s32 1, %s4
  %s7 = scalar_select 0, %s6, %s4
  loop: start=0, step=1, limit=4
  $region2: #{adap_cnn_forward.1} parent=0 // loop_pre_header
    _
  $region3: #{adap_cnn_forward.1} parent=0 // loop_header
    %s9 = sphi 0, %s13
    %p10 = scmp.ge.s32.totalorder %s9, 4
    %s16 = sphi 0, %s28
    %s17 = sphi 0, %s24
    %s18 = sphi 0, %s16
    %s19 = sphi 0, %s17
    %s20 = sphi 0, %s18
    %s21 = sphi 0, %s19
    %s31 = sphi 0, %s33
    %s34 = sphi 0, %s31
    %s35 = sphi 0, %s34
    %s51 = sphi 0, %s35
    %s57 = sphi 0, %s59
    %s60 = sphi 0, %s57
    %s61 = sphi 0, %s60
    %s77 = sphi 0, %s61
    %s83 = sphi 0, %s85
    %s86 = sphi 0, %s83
    %s87 = sphi 0, %s86
    %s103 = sphi 0, %s87
    %s111 = sphi 0, %s113
    %s114 = sphi 0, %s111
    %s115 = sphi 0, %s114
    %s131 = sphi 0, %s115
  $region4: #{adap_cnn_forward.1} parent=0 // loop_header_branch
    %12 = sbr.rel (%p10) target = $region8
  $region5: #{adap_cnn_forward.1} parent=0 // loop_body
    %s14 = ssub.s32 %s9, 1
    %s15 = ssub.s32 %s9, 2
    %s22 = sadd.s32 1, %s17
    %p23 = scmp.ge.s32.totalorder %s22, 1
    %s24 = scalar_select %p23, 0, %s22
    %s25 = sadd.s32 1, %s16
    %s26 = scalar_select %p23, %s25, %s16
    %p27 = scmp.ge.s32.totalorder %s26, 2
    %s28 = scalar_select %p27, 0, %s26
    %s29 = ssub.s32 %s16, %s28
    %p30 = scmp.eq.s32.totalorder %s29, 0
    %s32 = sadd.s32 %s31, 1
    %s33 = scalar_select %p30, %s31, %s32
    %p36 = pneg %p30
    %p37 = scmp.eq.s32.totalorder %s9, 1
    %p38 = por %p36, %p37
    %p39 = scmp.ne.s32.totalorder %s31, %s34
    %p40 = scmp.eq.s32.totalorder %s9, 0
    %p41 = por %p39, %p40
    %p42 = scmp.ne.s32.totalorder %s31, %s34
    %p43 = scmp.eq.s32.totalorder %s14, 1
    %p44 = por %p42, %p43
    %p45 = scmp.ne.s32.totalorder %s34, %s35
    %p46 = scmp.eq.s32.totalorder %s14, 0
    %p47 = por %p45, %p46
    %p48 = scmp.ne.s32.totalorder %s34, %s35
    %p49 = scmp.eq.s32.totalorder %s15, 1
    %p50 = por %p48, %p49
    %p52 = scmp.ne.s32.totalorder %s35, %s51
    %p53 = scmp.eq.s32.totalorder %s15, 0
    %p54 = por %p52, %p53
    %s55 = ssub.s32 %s16, %s28
    %p56 = scmp.eq.s32.totalorder %s55, 0
    %s58 = sadd.s32 %s57, 1
    %s59 = scalar_select %p56, %s57, %s58
    %p62 = pneg %p56
    %p63 = scmp.eq.s32.totalorder %s9, 1
    %p64 = por %p62, %p63
    %p65 = scmp.ne.s32.totalorder %s57, %s60
    %p66 = scmp.eq.s32.totalorder %s9, 0
    %p67 = por %p65, %p66
    %p68 = scmp.ne.s32.totalorder %s57, %s60
    %p69 = scmp.eq.s32.totalorder %s14, 1
    %p70 = por %p68, %p69
    %p71 = scmp.ne.s32.totalorder %s60, %s61
    %p72 = scmp.eq.s32.totalorder %s14, 0
    %p73 = por %p71, %p72
    %p74 = scmp.ne.s32.totalorder %s60, %s61
    %p75 = scmp.eq.s32.totalorder %s15, 1
    %p76 = por %p74, %p75
    %p78 = scmp.ne.s32.totalorder %s61, %s77
    %p79 = scmp.eq.s32.totalorder %s15, 0
    %p80 = por %p78, %p79
    %s81 = ssub.s32 %s16, %s28
    %p82 = scmp.eq.s32.totalorder %s81, 0
    %s84 = sadd.s32 %s83, 1
    %s85 = scalar_select %p82, %s83, %s84
    %p88 = pneg %p82
    %p89 = scmp.eq.s32.totalorder %s9, 1
    %p90 = por %p88, %p89
    %p91 = scmp.ne.s32.totalorder %s83, %s86
    %p92 = scmp.eq.s32.totalorder %s9, 0
    %p93 = por %p91, %p92
    %p94 = scmp.ne.s32.totalorder %s83, %s86
    %p95 = scmp.eq.s32.totalorder %s14, 1
    %p96 = por %p94, %p95
    %p97 = scmp.ne.s32.totalorder %s86, %s87
    %p98 = scmp.eq.s32.totalorder %s14, 0
    %p99 = por %p97, %p98
    %p100 = scmp.ne.s32.totalorder %s86, %s87
    %p101 = scmp.eq.s32.totalorder %s15, 1
    %p102 = por %p100, %p101
    %p104 = scmp.ne.s32.totalorder %s87, %s103
    %p105 = scmp.eq.s32.totalorder %s15, 0
    %p106 = por %p104, %p105
    %s107 = ssub.s32 %s16, %s28
    %s108 = ssub.s32 %s17, %s24
    %s109 = sor.u32 %s107, %s108
    %p110 = scmp.eq.s32.totalorder %s109, 0
    %s112 = sadd.s32 %s111, 1
    %s113 = scalar_select %p110, %s111, %s112
    %p116 = pneg %p110
    %p117 = scmp.eq.s32.totalorder %s9, 1
    %p118 = por %p116, %p117
    %p119 = scmp.ne.s32.totalorder %s111, %s114
    %p120 = scmp.eq.s32.totalorder %s9, 0
    %p121 = por %p119, %p120
    %p122 = scmp.ne.s32.totalorder %s111, %s114
    %p123 = scmp.eq.s32.totalorder %s14, 1
    %p124 = por %p122, %p123
    %p125 = scmp.ne.s32.totalorder %s114, %s115
    %p126 = scmp.eq.s32.totalorder %s14, 0
    %p127 = por %p125, %p126
    %p128 = scmp.ne.s32.totalorder %s114, %s115
    %p129 = scmp.eq.s32.totalorder %s15, 1
    %p130 = por %p128, %p129
    %p132 = scmp.ne.s32.totalorder %s115, %s131
    %p133 = scmp.eq.s32.totalorder %s15, 0
    %p134 = por %p132, %p133
    %p135 = scmp.le.s32.totalorder 1, %s9
    %p136 = scmp.lt.s32.totalorder %s9, 3
    %p137 = pnand %p135, %p136
    %p138 = pneg %p137
    // Predicated region
    $region9: #{adap_cnn_forward.1} parent=5 // pred_check
      _
    $region10: #{adap_cnn_forward.1} parent=5 // pred_check_branch
      %140 = sbr.rel (%p137) target = $region12
    $region11: #{adap_cnn_forward.1} parent=5 // pred_region
      %s141 = ssub.s32 %s9, 1
    $region12: #{adap_cnn_forward.1} parent=5 // pred_fallthru
      _
    %p142 = scmp.lt.s32.totalorder %s9, 2
    // Predicated region
    $region13: #{adap_cnn_forward.1} parent=5 // pred_check
      %p143 = pneg %p142
    $region14: #{adap_cnn_forward.1} parent=5 // pred_check_branch
      %145 = sbr.rel (%p143) target = $region16
    $region15: #{adap_cnn_forward.1} parent=5 // pred_region
      // Predicated region
      $region17: #{adap_cnn_forward.1} parent=15 // pred_check
        %p146 = pneg %p41
      $region18: #{adap_cnn_forward.1} parent=15 // pred_check_branch
        %148 = sbr.rel (%p146) target = $region20
      $region19: #{adap_cnn_forward.1} parent=15 // pred_region
        %p149 = scmp.lt.s32.totalorder %s16, 1
        %s150 = scalar_select %p149, %s16, 1
        %s151 = smul.addr %s150, 16
        %s152 = smul.addr %s151, 2
        %s153 = scalar_lea.vmem %s0, %s152
      $region20: #{adap_cnn_forward.1} parent=15 // pred_fallthru
        _
      // Predicated region
      $region21: #{adap_cnn_forward.1} parent=15 // pred_check
        %p154 = pneg %p67
      $region22: #{adap_cnn_forward.1} parent=15 // pred_check_branch
        %156 = sbr.rel (%p154) target = $region24
      $region23: #{adap_cnn_forward.1} parent=15 // pred_region
        %p157 = scmp.lt.s32.totalorder %s16, 1
        %s158 = scalar_select %p157, %s16, 1
        %s159 = smul.addr %s158, 4
        %s160 = scalar_lea.vmem %s1, %s159
      $region24: #{adap_cnn_forward.1} parent=15 // pred_fallthru
        _
      // Predicated region
      $region25: #{adap_cnn_forward.1} parent=15 // pred_check
        %p161 = pneg %p93
      $region26: #{adap_cnn_forward.1} parent=15 // pred_check_branch
        %163 = sbr.rel (%p161) target = $region28
      $region27: #{adap_cnn_forward.1} parent=15 // pred_region
        %p164 = scmp.lt.s32.totalorder %s16, 1
        %s165 = scalar_select %p164, %s16, 1
        %s166 = smul.addr %s165, 8
        %s167 = scalar_lea.vmem %s2, %s166
      $region28: #{adap_cnn_forward.1} parent=15 // pred_fallthru
        _
    $region16: #{adap_cnn_forward.1} parent=5 // pred_fallthru
      _
    %p168 = scmp.le.s32.totalorder 1, %s9
    %p169 = scmp.lt.s32.totalorder %s9, 3
    %p170 = pnand %p168, %p169
    %p171 = pneg %p170
    // Predicated region
    $region29: #{adap_cnn_forward.1} parent=5 // pred_check
      _
    $region30: #{adap_cnn_forward.1} parent=5 // pred_check_branch
      %173 = sbr.rel (%p170) target = $region32
    $region31: #{adap_cnn_forward.1} parent=5 // pred_region
      %s174 = ssub.s32 %s9, 1
      %p175 = scmp.lt.s32.totalorder %s18, 1
      %s176 = scalar_select %p175, %s18, 1
      %s177 = smul.addr %s176, 16
      %s178 = smul.addr %s177, 2
      %s179 = scalar_lea.vmem %s0, %s178
      %p180 = pneg %p47
      %p181 = pneg %p44
      %p182 = scmp.lt.s32.totalorder %s18, 1
      %s183 = scalar_select %p182, %s18, 1
      %s184 = smul.addr %s183, 4
      %s185 = scalar_lea.vmem %s1, %s184
      %p186 = pneg %p73
      %p187 = pneg %p70
      %p188 = scmp.lt.s32.totalorder %s18, 1
      %s189 = scalar_select %p188, %s18, 1
      %s190 = smul.addr %s189, 8
      %s191 = scalar_lea.vmem %s2, %s190
      %p192 = pneg %p99
      %p193 = pneg %p96
      %p194 = pneg %p127
      %p195 = pneg %p124
      %s196 = smul.u32 14, %s19
      %p197 = scmp.lt.s32.totalorder %s18, 1
      %s198 = scalar_select %p197, %s18, 1
      %p199 = scmp.lt.s32.totalorder %s196, 13
      %s200 = scalar_select %p199, %s196, 13
      %s201 = smul.addr %s198, 14
      %s202 = sadd.s32 %s200, %s201
      %s203 = smul.addr %s202, 8
      %s204 = scalar_lea.vmem %s3, %s203
      %p205 = scmp.lt.s32.totalorder %s18, 1
      %s206 = scalar_select %p205, %s18, 1
      %s207 = smul.addr %s206, 16
      %s208 = smul.addr %s207, 2
      %s209 = scalar_lea.vmem %s0, %s208
      %p210 = scmp.lt.s32.totalorder %s18, 1
      %s211 = scalar_select %p210, %s18, 1
      %s212 = smul.addr %s211, 4
      %s213 = scalar_lea.vmem %s1, %s212
      %p214 = scmp.lt.s32.totalorder %s18, 1
      %s215 = scalar_select %p214, %s18, 1
      %s216 = smul.addr %s215, 8
      %s217 = scalar_lea.vmem %s2, %s216
      %s218 = smul.u32 14, %s19
      %p219 = scmp.lt.s32.totalorder %s18, 1
      %s220 = scalar_select %p219, %s18, 1
      %p221 = scmp.lt.s32.totalorder %s218, 13
      %s222 = scalar_select %p221, %s218, 13
      %s223 = smul.addr %s220, 14
      %s224 = sadd.s32 %s222, %s223
      %s225 = smul.addr %s224, 8
      %s226 = scalar_lea.vmem %s3, %s225
      %s227 = smul.u32 14, %s19
      %s229 = smul.u32 %s19, 14
      %s230 = smul.addr %s229, 2
      %s231 = scalar_lea.vmem %s209, %s230
      %v232 = vld [vmem:[%s231] sm:$0x3]
      %v233 = vld [vmem:[%s231 + $0x2] sm:$0x3]
      %v234 = vld [vmem:[%s231 + $0x4] sm:$0x3]
      %v235 = vld [vmem:[%s231 + $0x6] sm:$0x3]
      %v236 = vld [vmem:[%s231 + $0x8] sm:$0x3]
      %v237 = vld [vmem:[%s231 + $0xa] sm:$0x3]
      %v238 = vld [vmem:[%s231 + $0xc] sm:$0x3]
      %v239 = vld [vmem:[%s231 + $0xe] sm:$0x3]
      %v240 = vld [vmem:[%s231 + $0x10] sm:$0x3]
      %v241 = vld [vmem:[%s231 + $0x12] sm:$0x3]
      %v242 = vld [vmem:[%s231 + $0x14] sm:$0x3]
      %v243 = vld [vmem:[%s231 + $0x16] sm:$0x3]
      %v244 = vld [vmem:[%s231 + $0x18] sm:$0x3]
      %v245 = vld [vmem:[%s231 + $0x1a] sm:$0x3]
      %vm246 = vcmask 107520
      %247 = vst.msk [vmem:[#allocation2] sm:$0x3] %vm246, %v232
      %248 = vst.msk [vmem:[#allocation2 + $0x14] sm:$0x3] %vm246, %v233
      %249 = vst.msk [vmem:[#allocation2 + $0x28] sm:$0x3] %vm246, %v234
      %250 = vst.msk [vmem:[#allocation2 + $0x3c] sm:$0x3] %vm246, %v235
      %251 = vst.msk [vmem:[#allocation2 + $0x50] sm:$0x3] %vm246, %v236
      %252 = vst.msk [vmem:[#allocation2 + $0x64] sm:$0x3] %vm246, %v237
      %253 = vst.msk [vmem:[#allocation2 + $0x78] sm:$0x3] %vm246, %v238
      %254 = vst.msk [vmem:[#allocation2 + $0x8c] sm:$0x3] %vm246, %v239
      %255 = vst.msk [vmem:[#allocation2 + $0xa0] sm:$0x3] %vm246, %v240
      %256 = vst.msk [vmem:[#allocation2 + $0xb4] sm:$0x3] %vm246, %v241
      %257 = vst.msk [vmem:[#allocation2 + $0xc8] sm:$0x3] %vm246, %v242
      %258 = vst.msk [vmem:[#allocation2 + $0xdc] sm:$0x3] %vm246, %v243
      %259 = vst.msk [vmem:[#allocation2 + $0xf0] sm:$0x3] %vm246, %v244
      %260 = vst.msk [vmem:[#allocation2 + $0x104] sm:$0x3] %vm246, %v245
      %v261 = vld [vmem:[%s231] sm:$0x3]
      %v262 = vld [vmem:[%s231 + $0x2] sm:$0x3]
      %v263 = vld [vmem:[%s231 + $0x4] sm:$0x3]
      %v264 = vld [vmem:[%s231 + $0x6] sm:$0x3]
      %v265 = vld [vmem:[%s231 + $0x8] sm:$0x3]
      %v266 = vld [vmem:[%s231 + $0xa] sm:$0x3]
      %v267 = vld [vmem:[%s231 + $0xc] sm:$0x3]
      %v268 = vld [vmem:[%s231 + $0xe] sm:$0x3]
      %v269 = vld [vmem:[%s231 + $0x10] sm:$0x3]
      %v270 = vld [vmem:[%s231 + $0x12] sm:$0x3]
      %v271 = vld [vmem:[%s231 + $0x14] sm:$0x3]
      %v272 = vld [vmem:[%s231 + $0x16] sm:$0x3]
      %v273 = vld [vmem:[%s231 + $0x18] sm:$0x3]
      %v274 = vld [vmem:[%s231 + $0x1a] sm:$0x3]
      %v289 = vcombine.low %v261, %v261
      %v291 = vunpack.c.l.s4 1983009808
      %v292 = vunpack.c.0.s8 %v291
      %v293 = vlaneseq
      %v294 = vshrl.u32 %v293, 7
      %v295 = vsub.s32 %v292, %v294
      %v296 = vrot.slane %v289, %v295
      %v297 = vcombine.low %v262, %v262
      %v299 = vunpack.c.l.s4 1983009808
      %v300 = vunpack.c.0.s8 %v299
      %v301 = vlaneseq
      %v302 = vshrl.u32 %v301, 7
      %v303 = vsub.s32 %v300, %v302
      %v304 = vrot.slane %v297, %v303
      %v305 = vcombine.low %v263, %v263
      %v307 = vunpack.c.l.s4 1983009808
      %v308 = vunpack.c.0.s8 %v307
      %v309 = vlaneseq
      %v310 = vshrl.u32 %v309, 7
      %v311 = vsub.s32 %v308, %v310
      %v312 = vrot.slane %v305, %v311
      %v313 = vcombine.low %v264, %v264
      %v315 = vunpack.c.l.s4 1983009808
      %v316 = vunpack.c.0.s8 %v315
      %v317 = vlaneseq
      %v318 = vshrl.u32 %v317, 7
      %v319 = vsub.s32 %v316, %v318
      %v320 = vrot.slane %v313, %v319
      %v321 = vcombine.low %v265, %v265
      %v323 = vunpack.c.l.s4 1983009808
      %v324 = vunpack.c.0.s8 %v323
      %v325 = vlaneseq
      %v326 = vshrl.u32 %v325, 7
      %v327 = vsub.s32 %v324, %v326
      %v328 = vrot.slane %v321, %v327
      %v329 = vcombine.low %v266, %v266
      %v331 = vunpack.c.l.s4 1983009808
      %v332 = vunpack.c.0.s8 %v331
      %v333 = vlaneseq
      %v334 = vshrl.u32 %v333, 7
      %v335 = vsub.s32 %v332, %v334
      %v336 = vrot.slane %v329, %v335
      %v337 = vcombine.low %v267, %v267
      %v339 = vunpack.c.l.s4 1983009808
      %v340 = vunpack.c.0.s8 %v339
      %v341 = vlaneseq
      %v342 = vshrl.u32 %v341, 7
      %v343 = vsub.s32 %v340, %v342
      %v344 = vrot.slane %v337, %v343
      %v345 = vcombine.low %v268, %v268
      %v347 = vunpack.c.l.s4 1983009808
      %v348 = vunpack.c.0.s8 %v347
      %v349 = vlaneseq
      %v350 = vshrl.u32 %v349, 7
      %v351 = vsub.s32 %v348, %v350
      %v352 = vrot.slane %v345, %v351
      %v353 = vcombine.low %v269, %v269
      %v355 = vunpack.c.l.s4 1983009808
      %v356 = vunpack.c.0.s8 %v355
      %v357 = vlaneseq
      %v358 = vshrl.u32 %v357, 7
      %v359 = vsub.s32 %v356, %v358
      %v360 = vrot.slane %v353, %v359
      %v361 = vcombine.low %v270, %v270
      %v363 = vunpack.c.l.s4 1983009808
      %v364 = vunpack.c.0.s8 %v363
      %v365 = vlaneseq
      %v366 = vshrl.u32 %v365, 7
      %v367 = vsub.s32 %v364, %v366
      %v368 = vrot.slane %v361, %v367
      %v369 = vcombine.low %v271, %v271
      %v371 = vunpack.c.l.s4 1983009808
      %v372 = vunpack.c.0.s8 %v371
      %v373 = vlaneseq
      %v374 = vshrl.u32 %v373, 7
      %v375 = vsub.s32 %v372, %v374
      %v376 = vrot.slane %v369, %v375
      %v377 = vcombine.low %v272, %v272
      %v379 = vunpack.c.l.s4 1983009808
      %v380 = vunpack.c.0.s8 %v379
      %v381 = vlaneseq
      %v382 = vshrl.u32 %v381, 7
      %v383 = vsub.s32 %v380, %v382
      %v384 = vrot.slane %v377, %v383
      %v385 = vcombine.low %v273, %v273
      %v387 = vunpack.c.l.s4 1983009808
      %v388 = vunpack.c.0.s8 %v387
      %v389 = vlaneseq
      %v390 = vshrl.u32 %v389, 7
      %v391 = vsub.s32 %v388, %v390
      %v392 = vrot.slane %v385, %v391
      %v393 = vcombine.low %v274, %v274
      %v395 = vunpack.c.l.s4 1983009808
      %v396 = vunpack.c.0.s8 %v395
      %v397 = vlaneseq
      %v398 = vshrl.u32 %v397, 7
      %v399 = vsub.s32 %v396, %v398
      %v400 = vrot.slane %v393, %v399
      %401 = vrot.lane.b32.xlu0 %v296, 127
      %v402 = vpop.permute.xlu0 %401
      %403 = vrot.lane.b32.xlu0 %v304, 127
      %v404 = vpop.permute.xlu0 %403
      %405 = vrot.lane.b32.xlu0 %v312, 127
      %v406 = vpop.permute.xlu0 %405
      %407 = vrot.lane.b32.xlu0 %v320, 127
      %v408 = vpop.permute.xlu0 %407
      %409 = vrot.lane.b32.xlu0 %v328, 127
      %v410 = vpop.permute.xlu0 %409
      %411 = vrot.lane.b32.xlu0 %v336, 127
      %v412 = vpop.permute.xlu0 %411
      %413 = vrot.lane.b32.xlu0 %v344, 127
      %v414 = vpop.permute.xlu0 %413
      %415 = vrot.lane.b32.xlu0 %v352, 127
      %v416 = vpop.permute.xlu0 %415
      %417 = vrot.lane.b32.xlu0 %v360, 127
      %v418 = vpop.permute.xlu0 %417
      %419 = vrot.lane.b32.xlu0 %v368, 127
      %v420 = vpop.permute.xlu0 %419
      %421 = vrot.lane.b32.xlu0 %v376, 127
      %v422 = vpop.permute.xlu0 %421
      %423 = vrot.lane.b32.xlu0 %v384, 127
      %v424 = vpop.permute.xlu0 %423
      %425 = vrot.lane.b32.xlu0 %v392, 127
      %v426 = vpop.permute.xlu0 %425
      %427 = vrot.lane.b32.xlu0 %v400, 127
      %v428 = vpop.permute.xlu0 %427
      %vm443 = vcmask 109570
      %444 = vst.msk [vmem:[#allocation2] sm:$0xc] %vm443, %v402
      %445 = vst.msk [vmem:[#allocation2 + $0x14] sm:$0xc] %vm443, %v404
      %446 = vst.msk [vmem:[#allocation2 + $0x28] sm:$0xc] %vm443, %v406
      %447 = vst.msk [vmem:[#allocation2 + $0x3c] sm:$0xc] %vm443, %v408
      %448 = vst.msk [vmem:[#allocation2 + $0x50] sm:$0xc] %vm443, %v410
      %449 = vst.msk [vmem:[#allocation2 + $0x64] sm:$0xc] %vm443, %v412
      %450 = vst.msk [vmem:[#allocation2 + $0x78] sm:$0xc] %vm443, %v414
      %451 = vst.msk [vmem:[#allocation2 + $0x8c] sm:$0xc] %vm443, %v416
      %452 = vst.msk [vmem:[#allocation2 + $0xa0] sm:$0xc] %vm443, %v418
      %453 = vst.msk [vmem:[#allocation2 + $0xb4] sm:$0xc] %vm443, %v420
      %454 = vst.msk [vmem:[#allocation2 + $0xc8] sm:$0xc] %vm443, %v422
      %455 = vst.msk [vmem:[#allocation2 + $0xdc] sm:$0xc] %vm443, %v424
      %456 = vst.msk [vmem:[#allocation2 + $0xf0] sm:$0xc] %vm443, %v426
      %457 = vst.msk [vmem:[#allocation2 + $0x104] sm:$0xc] %vm443, %v428
      %v458 = vld [vmem:[%s231] sm:$0x3]
      %v459 = vld [vmem:[%s231 + $0x2] sm:$0x3]
      %v460 = vld [vmem:[%s231 + $0x4] sm:$0x3]
      %v461 = vld [vmem:[%s231 + $0x6] sm:$0x3]
      %v462 = vld [vmem:[%s231 + $0x8] sm:$0x3]
      %v463 = vld [vmem:[%s231 + $0xa] sm:$0x3]
      %v464 = vld [vmem:[%s231 + $0xc] sm:$0x3]
      %v465 = vld [vmem:[%s231 + $0xe] sm:$0x3]
      %v466 = vld [vmem:[%s231 + $0x10] sm:$0x3]
      %v467 = vld [vmem:[%s231 + $0x12] sm:$0x3]
      %v468 = vld [vmem:[%s231 + $0x14] sm:$0x3]
      %v469 = vld [vmem:[%s231 + $0x16] sm:$0x3]
      %v470 = vld [vmem:[%s231 + $0x18] sm:$0x3]
      %v471 = vld [vmem:[%s231 + $0x1a] sm:$0x3]
      %v487 = vunpack.c.l.s4 1983009808
      %v488 = vunpack.c.0.s8 %v487
      %v489 = vlaneseq
      %v490 = vshrl.u32 %v489, 7
      %v491 = vsub.s32 %v488, %v490
      %v492 = vrot.slane %v458, %v491
      %v494 = vunpack.c.l.s4 1983009808
      %v495 = vunpack.c.0.s8 %v494
      %v496 = vlaneseq
      %v497 = vshrl.u32 %v496, 7
      %v498 = vsub.s32 %v495, %v497
      %v499 = vrot.slane %v459, %v498
      %v501 = vunpack.c.l.s4 1983009808
      %v502 = vunpack.c.0.s8 %v501
      %v503 = vlaneseq
      %v504 = vshrl.u32 %v503, 7
      %v505 = vsub.s32 %v502, %v504
      %v506 = vrot.slane %v460, %v505
      %v508 = vunpack.c.l.s4 1983009808
      %v509 = vunpack.c.0.s8 %v508
      %v510 = vlaneseq
      %v511 = vshrl.u32 %v510, 7
      %v512 = vsub.s32 %v509, %v511
      %v513 = vrot.slane %v461, %v512
      %v515 = vunpack.c.l.s4 1983009808
      %v516 = vunpack.c.0.s8 %v515
      %v517 = vlaneseq
      %v518 = vshrl.u32 %v517, 7
      %v519 = vsub.s32 %v516, %v518
      %v520 = vrot.slane %v462, %v519
      %v522 = vunpack.c.l.s4 1983009808
      %v523 = vunpack.c.0.s8 %v522
      %v524 = vlaneseq
      %v525 = vshrl.u32 %v524, 7
      %v526 = vsub.s32 %v523, %v525
      %v527 = vrot.slane %v463, %v526
      %v529 = vunpack.c.l.s4 1983009808
      %v530 = vunpack.c.0.s8 %v529
      %v531 = vlaneseq
      %v532 = vshrl.u32 %v531, 7
      %v533 = vsub.s32 %v530, %v532
      %v534 = vrot.slane %v464, %v533
      %v536 = vunpack.c.l.s4 1983009808
      %v537 = vunpack.c.0.s8 %v536
      %v538 = vlaneseq
      %v539 = vshrl.u32 %v538, 7
      %v540 = vsub.s32 %v537, %v539
      %v541 = vrot.slane %v465, %v540
      %v543 = vunpack.c.l.s4 1983009808
      %v544 = vunpack.c.0.s8 %v543
      %v545 = vlaneseq
      %v546 = vshrl.u32 %v545, 7
      %v547 = vsub.s32 %v544, %v546
      %v548 = vrot.slane %v466, %v547
      %v550 = vunpack.c.l.s4 1983009808
      %v551 = vunpack.c.0.s8 %v550
      %v552 = vlaneseq
      %v553 = vshrl.u32 %v552, 7
      %v554 = vsub.s32 %v551, %v553
      %v555 = vrot.slane %v467, %v554
      %v557 = vunpack.c.l.s4 1983009808
      %v558 = vunpack.c.0.s8 %v557
      %v559 = vlaneseq
      %v560 = vshrl.u32 %v559, 7
      %v561 = vsub.s32 %v558, %v560
      %v562 = vrot.slane %v468, %v561
      %v564 = vunpack.c.l.s4 1983009808
      %v565 = vunpack.c.0.s8 %v564
      %v566 = vlaneseq
      %v567 = vshrl.u32 %v566, 7
      %v568 = vsub.s32 %v565, %v567
      %v569 = vrot.slane %v469, %v568
      %v571 = vunpack.c.l.s4 1983009808
      %v572 = vunpack.c.0.s8 %v571
      %v573 = vlaneseq
      %v574 = vshrl.u32 %v573, 7
      %v575 = vsub.s32 %v572, %v574
      %v576 = vrot.slane %v470, %v575
      %v578 = vunpack.c.l.s4 1983009808
      %v579 = vunpack.c.0.s8 %v578
      %v580 = vlaneseq
      %v581 = vshrl.u32 %v580, 7
      %v582 = vsub.s32 %v579, %v581
      %v583 = vrot.slane %v471, %v582
      %584 = vrot.lane.b32.xlu0 %v492, 126
      %v585 = vpop.permute.xlu0 %584
      %586 = vrot.lane.b32.xlu0 %v499, 126
      %v587 = vpop.permute.xlu0 %586
      %588 = vrot.lane.b32.xlu0 %v506, 126
      %v589 = vpop.permute.xlu0 %588
      %590 = vrot.lane.b32.xlu0 %v513, 126
      %v591 = vpop.permute.xlu0 %590
      %592 = vrot.lane.b32.xlu0 %v520, 126
      %v593 = vpop.permute.xlu0 %592
      %594 = vrot.lane.b32.xlu0 %v527, 126
      %v595 = vpop.permute.xlu0 %594
      %596 = vrot.lane.b32.xlu0 %v534, 126
      %v597 = vpop.permute.xlu0 %596
      %598 = vrot.lane.b32.xlu0 %v541, 126
      %v599 = vpop.permute.xlu0 %598
      %600 = vrot.lane.b32.xlu0 %v548, 126
      %v601 = vpop.permute.xlu0 %600
      %602 = vrot.lane.b32.xlu0 %v555, 126
      %v603 = vpop.permute.xlu0 %602
      %604 = vrot.lane.b32.xlu0 %v562, 126
      %v605 = vpop.permute.xlu0 %604
      %606 = vrot.lane.b32.xlu0 %v569, 126
      %v607 = vpop.permute.xlu0 %606
      %608 = vrot.lane.b32.xlu0 %v576, 126
      %v609 = vpop.permute.xlu0 %608
      %610 = vrot.lane.b32.xlu0 %v583, 126
      %v611 = vpop.permute.xlu0 %610
      %626 = vst.msk [vmem:[#allocation2 + $0x4] sm:$0x3] %vm246, %v585
      %627 = vst.msk [vmem:[#allocation2 + $0x18] sm:$0x3] %vm246, %v587
      %628 = vst.msk [vmem:[#allocation2 + $0x2c] sm:$0x3] %vm246, %v589
      %629 = vst.msk [vmem:[#allocation2 + $0x40] sm:$0x3] %vm246, %v591
      %630 = vst.msk [vmem:[#allocation2 + $0x54] sm:$0x3] %vm246, %v593
      %631 = vst.msk [vmem:[#allocation2 + $0x68] sm:$0x3] %vm246, %v595
      %632 = vst.msk [vmem:[#allocation2 + $0x7c] sm:$0x3] %vm246, %v597
      %633 = vst.msk [vmem:[#allocation2 + $0x90] sm:$0x3] %vm246, %v599
      %634 = vst.msk [vmem:[#allocation2 + $0xa4] sm:$0x3] %vm246, %v601
      %635 = vst.msk [vmem:[#allocation2 + $0xb8] sm:$0x3] %vm246, %v603
      %636 = vst.msk [vmem:[#allocation2 + $0xcc] sm:$0x3] %vm246, %v605
      %637 = vst.msk [vmem:[#allocation2 + $0xe0] sm:$0x3] %vm246, %v607
      %638 = vst.msk [vmem:[#allocation2 + $0xf4] sm:$0x3] %vm246, %v609
      %639 = vst.msk [vmem:[#allocation2 + $0x108] sm:$0x3] %vm246, %v611
      %s640 = sadd.s32 %s229, 1
      %s641 = smul.addr %s640, 2
      %s642 = scalar_lea.vmem %s209, %s641
      %v643 = vld [vmem:[%s642] sm:$0x3]
      %v644 = vld [vmem:[%s642 + $0x2] sm:$0x3]
      %v645 = vld [vmem:[%s642 + $0x4] sm:$0x3]
      %v646 = vld [vmem:[%s642 + $0x6] sm:$0x3]
      %v647 = vld [vmem:[%s642 + $0x8] sm:$0x3]
      %v648 = vld [vmem:[%s642 + $0xa] sm:$0x3]
      %v649 = vld [vmem:[%s642 + $0xc] sm:$0x3]
      %v650 = vld [vmem:[%s642 + $0xe] sm:$0x3]
      %v651 = vld [vmem:[%s642 + $0x10] sm:$0x3]
      %v652 = vld [vmem:[%s642 + $0x12] sm:$0x3]
      %v653 = vld [vmem:[%s642 + $0x14] sm:$0x3]
      %v654 = vld [vmem:[%s642 + $0x16] sm:$0x3]
      %v655 = vld [vmem:[%s642 + $0x18] sm:$0x3]
      %v656 = vld [vmem:[%s642 + $0x1a] sm:$0x3]
      %v671 = vcombine.low %v643, %v643
      %v673 = vunpack.c.l.s4 1983009808
      %v674 = vunpack.c.0.s8 %v673
      %v675 = vlaneseq
      %v676 = vshrl.u32 %v675, 7
      %v677 = vsub.s32 %v674, %v676
      %v678 = vrot.slane %v671, %v677
      %v679 = vcombine.low %v644, %v644
      %v681 = vunpack.c.l.s4 1983009808
      %v682 = vunpack.c.0.s8 %v681
      %v683 = vlaneseq
      %v684 = vshrl.u32 %v683, 7
      %v685 = vsub.s32 %v682, %v684
      %v686 = vrot.slane %v679, %v685
      %v687 = vcombine.low %v645, %v645
      %v689 = vunpack.c.l.s4 1983009808
      %v690 = vunpack.c.0.s8 %v689
      %v691 = vlaneseq
      %v692 = vshrl.u32 %v691, 7
      %v693 = vsub.s32 %v690, %v692
      %v694 = vrot.slane %v687, %v693
      %v695 = vcombine.low %v646, %v646
      %v697 = vunpack.c.l.s4 1983009808
      %v698 = vunpack.c.0.s8 %v697
      %v699 = vlaneseq
      %v700 = vshrl.u32 %v699, 7
      %v701 = vsub.s32 %v698, %v700
      %v702 = vrot.slane %v695, %v701
      %v703 = vcombine.low %v647, %v647
      %v705 = vunpack.c.l.s4 1983009808
      %v706 = vunpack.c.0.s8 %v705
      %v707 = vlaneseq
      %v708 = vshrl.u32 %v707, 7
      %v709 = vsub.s32 %v706, %v708
      %v710 = vrot.slane %v703, %v709
      %v711 = vcombine.low %v648, %v648
      %v713 = vunpack.c.l.s4 1983009808
      %v714 = vunpack.c.0.s8 %v713
      %v715 = vlaneseq
      %v716 = vshrl.u32 %v715, 7
      %v717 = vsub.s32 %v714, %v716
      %v718 = vrot.slane %v711, %v717
      %v719 = vcombine.low %v649, %v649
      %v721 = vunpack.c.l.s4 1983009808
      %v722 = vunpack.c.0.s8 %v721
      %v723 = vlaneseq
      %v724 = vshrl.u32 %v723, 7
      %v725 = vsub.s32 %v722, %v724
      %v726 = vrot.slane %v719, %v725
      %v727 = vcombine.low %v650, %v650
      %v729 = vunpack.c.l.s4 1983009808
      %v730 = vunpack.c.0.s8 %v729
      %v731 = vlaneseq
      %v732 = vshrl.u32 %v731, 7
      %v733 = vsub.s32 %v730, %v732
      %v734 = vrot.slane %v727, %v733
      %v735 = vcombine.low %v651, %v651
      %v737 = vunpack.c.l.s4 1983009808
      %v738 = vunpack.c.0.s8 %v737
      %v739 = vlaneseq
      %v740 = vshrl.u32 %v739, 7
      %v741 = vsub.s32 %v738, %v740
      %v742 = vrot.slane %v735, %v741
      %v743 = vcombine.low %v652, %v652
      %v745 = vunpack.c.l.s4 1983009808
      %v746 = vunpack.c.0.s8 %v745
      %v747 = vlaneseq
      %v748 = vshrl.u32 %v747, 7
      %v749 = vsub.s32 %v746, %v748
      %v750 = vrot.slane %v743, %v749
      %v751 = vcombine.low %v653, %v653
      %v753 = vunpack.c.l.s4 1983009808
      %v754 = vunpack.c.0.s8 %v753
      %v755 = vlaneseq
      %v756 = vshrl.u32 %v755, 7
      %v757 = vsub.s32 %v754, %v756
      %v758 = vrot.slane %v751, %v757
      %v759 = vcombine.low %v654, %v654
      %v761 = vunpack.c.l.s4 1983009808
      %v762 = vunpack.c.0.s8 %v761
      %v763 = vlaneseq
      %v764 = vshrl.u32 %v763, 7
      %v765 = vsub.s32 %v762, %v764
      %v766 = vrot.slane %v759, %v765
      %v767 = vcombine.low %v655, %v655
      %v769 = vunpack.c.l.s4 1983009808
      %v770 = vunpack.c.0.s8 %v769
      %v771 = vlaneseq
      %v772 = vshrl.u32 %v771, 7
      %v773 = vsub.s32 %v770, %v772
      %v774 = vrot.slane %v767, %v773
      %v775 = vcombine.low %v656, %v656
      %v777 = vunpack.c.l.s4 1983009808
      %v778 = vunpack.c.0.s8 %v777
      %v779 = vlaneseq
      %v780 = vshrl.u32 %v779, 7
      %v781 = vsub.s32 %v778, %v780
      %v782 = vrot.slane %v775, %v781
      %797 = vst.msk [vmem:[#allocation2 + $0x4] sm:$0xc] %vm443, %v678
      %798 = vst.msk [vmem:[#allocation2 + $0x18] sm:$0xc] %vm443, %v686
      %799 = vst.msk [vmem:[#allocation2 + $0x2c] sm:$0xc] %vm443, %v694
      %800 = vst.msk [vmem:[#allocation2 + $0x40] sm:$0xc] %vm443, %v702
      %801 = vst.msk [vmem:[#allocation2 + $0x54] sm:$0xc] %vm443, %v710
      %802 = vst.msk [vmem:[#allocation2 + $0x68] sm:$0xc] %vm443, %v718
      %803 = vst.msk [vmem:[#allocation2 + $0x7c] sm:$0xc] %vm443, %v726
      %804 = vst.msk [vmem:[#allocation2 + $0x90] sm:$0xc] %vm443, %v734
      %805 = vst.msk [vmem:[#allocation2 + $0xa4] sm:$0xc] %vm443, %v742
      %806 = vst.msk [vmem:[#allocation2 + $0xb8] sm:$0xc] %vm443, %v750
      %807 = vst.msk [vmem:[#allocation2 + $0xcc] sm:$0xc] %vm443, %v758
      %808 = vst.msk [vmem:[#allocation2 + $0xe0] sm:$0xc] %vm443, %v766
      %809 = vst.msk [vmem:[#allocation2 + $0xf4] sm:$0xc] %vm443, %v774
      %810 = vst.msk [vmem:[#allocation2 + $0x108] sm:$0xc] %vm443, %v782
      %v811 = vld [vmem:[%s642] sm:$0x3]
      %v812 = vld [vmem:[%s642 + $0x2] sm:$0x3]
      %v813 = vld [vmem:[%s642 + $0x4] sm:$0x3]
      %v814 = vld [vmem:[%s642 + $0x6] sm:$0x3]
      %v815 = vld [vmem:[%s642 + $0x8] sm:$0x3]
      %v816 = vld [vmem:[%s642 + $0xa] sm:$0x3]
      %v817 = vld [vmem:[%s642 + $0xc] sm:$0x3]
      %v818 = vld [vmem:[%s642 + $0xe] sm:$0x3]
      %v819 = vld [vmem:[%s642 + $0x10] sm:$0x3]
      %v820 = vld [vmem:[%s642 + $0x12] sm:$0x3]
      %v821 = vld [vmem:[%s642 + $0x14] sm:$0x3]
      %v822 = vld [vmem:[%s642 + $0x16] sm:$0x3]
      %v823 = vld [vmem:[%s642 + $0x18] sm:$0x3]
      %v824 = vld [vmem:[%s642 + $0x1a] sm:$0x3]
      %v840 = vunpack.c.l.s4 1983009808
      %v841 = vunpack.c.0.s8 %v840
      %v842 = vlaneseq
      %v843 = vshrl.u32 %v842, 7
      %v844 = vsub.s32 %v841, %v843
      %v845 = vrot.slane %v811, %v844
      %v847 = vunpack.c.l.s4 1983009808
      %v848 = vunpack.c.0.s8 %v847
      %v849 = vlaneseq
      %v850 = vshrl.u32 %v849, 7
      %v851 = vsub.s32 %v848, %v850
      %v852 = vrot.slane %v812, %v851
      %v854 = vunpack.c.l.s4 1983009808
      %v855 = vunpack.c.0.s8 %v854
      %v856 = vlaneseq
      %v857 = vshrl.u32 %v856, 7
      %v858 = vsub.s32 %v855, %v857
      %v859 = vrot.slane %v813, %v858
      %v861 = vunpack.c.l.s4 1983009808
      %v862 = vunpack.c.0.s8 %v861
      %v863 = vlaneseq
      %v864 = vshrl.u32 %v863, 7
      %v865 = vsub.s32 %v862, %v864
      %v866 = vrot.slane %v814, %v865
      %v868 = vunpack.c.l.s4 1983009808
      %v869 = vunpack.c.0.s8 %v868
      %v870 = vlaneseq
      %v871 = vshrl.u32 %v870, 7
      %v872 = vsub.s32 %v869, %v871
      %v873 = vrot.slane %v815, %v872
      %v875 = vunpack.c.l.s4 1983009808
      %v876 = vunpack.c.0.s8 %v875
      %v877 = vlaneseq
      %v878 = vshrl.u32 %v877, 7
      %v879 = vsub.s32 %v876, %v878
      %v880 = vrot.slane %v816, %v879
      %v882 = vunpack.c.l.s4 1983009808
      %v883 = vunpack.c.0.s8 %v882
      %v884 = vlaneseq
      %v885 = vshrl.u32 %v884, 7
      %v886 = vsub.s32 %v883, %v885
      %v887 = vrot.slane %v817, %v886
      %v889 = vunpack.c.l.s4 1983009808
      %v890 = vunpack.c.0.s8 %v889
      %v891 = vlaneseq
      %v892 = vshrl.u32 %v891, 7
      %v893 = vsub.s32 %v890, %v892
      %v894 = vrot.slane %v818, %v893
      %v896 = vunpack.c.l.s4 1983009808
      %v897 = vunpack.c.0.s8 %v896
      %v898 = vlaneseq
      %v899 = vshrl.u32 %v898, 7
      %v900 = vsub.s32 %v897, %v899
      %v901 = vrot.slane %v819, %v900
      %v903 = vunpack.c.l.s4 1983009808
      %v904 = vunpack.c.0.s8 %v903
      %v905 = vlaneseq
      %v906 = vshrl.u32 %v905, 7
      %v907 = vsub.s32 %v904, %v906
      %v908 = vrot.slane %v820, %v907
      %v910 = vunpack.c.l.s4 1983009808
      %v911 = vunpack.c.0.s8 %v910
      %v912 = vlaneseq
      %v913 = vshrl.u32 %v912, 7
      %v914 = vsub.s32 %v911, %v913
      %v915 = vrot.slane %v821, %v914
      %v917 = vunpack.c.l.s4 1983009808
      %v918 = vunpack.c.0.s8 %v917
      %v919 = vlaneseq
      %v920 = vshrl.u32 %v919, 7
      %v921 = vsub.s32 %v918, %v920
      %v922 = vrot.slane %v822, %v921
      %v924 = vunpack.c.l.s4 1983009808
      %v925 = vunpack.c.0.s8 %v924
      %v926 = vlaneseq
      %v927 = vshrl.u32 %v926, 7
      %v928 = vsub.s32 %v925, %v927
      %v929 = vrot.slane %v823, %v928
      %v931 = vunpack.c.l.s4 1983009808
      %v932 = vunpack.c.0.s8 %v931
      %v933 = vlaneseq
      %v934 = vshrl.u32 %v933, 7
      %v935 = vsub.s32 %v932, %v934
      %v936 = vrot.slane %v824, %v935
      %937 = vrot.lane.b32.xlu0 %v845, 127
      %v938 = vpop.permute.xlu0 %937
      %939 = vrot.lane.b32.xlu0 %v852, 127
      %v940 = vpop.permute.xlu0 %939
      %941 = vrot.lane.b32.xlu0 %v859, 127
      %v942 = vpop.permute.xlu0 %941
      %943 = vrot.lane.b32.xlu0 %v866, 127
      %v944 = vpop.permute.xlu0 %943
      %945 = vrot.lane.b32.xlu0 %v873, 127
      %v946 = vpop.permute.xlu0 %945
      %947 = vrot.lane.b32.xlu0 %v880, 127
      %v948 = vpop.permute.xlu0 %947
      %949 = vrot.lane.b32.xlu0 %v887, 127
      %v950 = vpop.permute.xlu0 %949
      %951 = vrot.lane.b32.xlu0 %v894, 127
      %v952 = vpop.permute.xlu0 %951
      %953 = vrot.lane.b32.xlu0 %v901, 127
      %v954 = vpop.permute.xlu0 %953
      %955 = vrot.lane.b32.xlu0 %v908, 127
      %v956 = vpop.permute.xlu0 %955
      %957 = vrot.lane.b32.xlu0 %v915, 127
      %v958 = vpop.permute.xlu0 %957
      %959 = vrot.lane.b32.xlu0 %v922, 127
      %v960 = vpop.permute.xlu0 %959
      %961 = vrot.lane.b32.xlu0 %v929, 127
      %v962 = vpop.permute.xlu0 %961
      %963 = vrot.lane.b32.xlu0 %v936, 127
      %v964 = vpop.permute.xlu0 %963
      %979 = vst.msk [vmem:[#allocation2 + $0x8] sm:$0x3] %vm246, %v938
      %980 = vst.msk [vmem:[#allocation2 + $0x1c] sm:$0x3] %vm246, %v940
      %981 = vst.msk [vmem:[#allocation2 + $0x30] sm:$0x3] %vm246, %v942
      %982 = vst.msk [vmem:[#allocation2 + $0x44] sm:$0x3] %vm246, %v944
      %983 = vst.msk [vmem:[#allocation2 + $0x58] sm:$0x3] %vm246, %v946
      %984 = vst.msk [vmem:[#allocation2 + $0x6c] sm:$0x3] %vm246, %v948
      %985 = vst.msk [vmem:[#allocation2 + $0x80] sm:$0x3] %vm246, %v950
      %986 = vst.msk [vmem:[#allocation2 + $0x94] sm:$0x3] %vm246, %v952
      %987 = vst.msk [vmem:[#allocation2 + $0xa8] sm:$0x3] %vm246, %v954
      %988 = vst.msk [vmem:[#allocation2 + $0xbc] sm:$0x3] %vm246, %v956
      %989 = vst.msk [vmem:[#allocation2 + $0xd0] sm:$0x3] %vm246, %v958
      %990 = vst.msk [vmem:[#allocation2 + $0xe4] sm:$0x3] %vm246, %v960
      %991 = vst.msk [vmem:[#allocation2 + $0xf8] sm:$0x3] %vm246, %v962
      %992 = vst.msk [vmem:[#allocation2 + $0x10c] sm:$0x3] %vm246, %v964
      %v993 = vld [vmem:[%s642] sm:$0x3]
      %v994 = vld [vmem:[%s642 + $0x2] sm:$0x3]
      %v995 = vld [vmem:[%s642 + $0x4] sm:$0x3]
      %v996 = vld [vmem:[%s642 + $0x6] sm:$0x3]
      %v997 = vld [vmem:[%s642 + $0x8] sm:$0x3]
      %v998 = vld [vmem:[%s642 + $0xa] sm:$0x3]
      %v999 = vld [vmem:[%s642 + $0xc] sm:$0x3]
      %v1000 = vld [vmem:[%s642 + $0xe] sm:$0x3]
      %v1001 = vld [vmem:[%s642 + $0x10] sm:$0x3]
      %v1002 = vld [vmem:[%s642 + $0x12] sm:$0x3]
      %v1003 = vld [vmem:[%s642 + $0x14] sm:$0x3]
      %v1004 = vld [vmem:[%s642 + $0x16] sm:$0x3]
      %v1005 = vld [vmem:[%s642 + $0x18] sm:$0x3]
      %v1006 = vld [vmem:[%s642 + $0x1a] sm:$0x3]
      %v1021 = vcombine.low %v993, %v993
      %v1023 = vunpack.c.l.s4 1983009808
      %v1024 = vunpack.c.0.s8 %v1023
      %v1025 = vlaneseq
      %v1026 = vshrl.u32 %v1025, 7
      %v1027 = vsub.s32 %v1024, %v1026
      %v1028 = vrot.slane %v1021, %v1027
      %v1029 = vcombine.low %v994, %v994
      %v1031 = vunpack.c.l.s4 1983009808
      %v1032 = vunpack.c.0.s8 %v1031
      %v1033 = vlaneseq
      %v1034 = vshrl.u32 %v1033, 7
      %v1035 = vsub.s32 %v1032, %v1034
      %v1036 = vrot.slane %v1029, %v1035
      %v1037 = vcombine.low %v995, %v995
      %v1039 = vunpack.c.l.s4 1983009808
      %v1040 = vunpack.c.0.s8 %v1039
      %v1041 = vlaneseq
      %v1042 = vshrl.u32 %v1041, 7
      %v1043 = vsub.s32 %v1040, %v1042
      %v1044 = vrot.slane %v1037, %v1043
      %v1045 = vcombine.low %v996, %v996
      %v1047 = vunpack.c.l.s4 1983009808
      %v1048 = vunpack.c.0.s8 %v1047
      %v1049 = vlaneseq
      %v1050 = vshrl.u32 %v1049, 7
      %v1051 = vsub.s32 %v1048, %v1050
      %v1052 = vrot.slane %v1045, %v1051
      %v1053 = vcombine.low %v997, %v997
      %v1055 = vunpack.c.l.s4 1983009808
      %v1056 = vunpack.c.0.s8 %v1055
      %v1057 = vlaneseq
      %v1058 = vshrl.u32 %v1057, 7
      %v1059 = vsub.s32 %v1056, %v1058
      %v1060 = vrot.slane %v1053, %v1059
      %v1061 = vcombine.low %v998, %v998
      %v1063 = vunpack.c.l.s4 1983009808
      %v1064 = vunpack.c.0.s8 %v1063
      %v1065 = vlaneseq
      %v1066 = vshrl.u32 %v1065, 7
      %v1067 = vsub.s32 %v1064, %v1066
      %v1068 = vrot.slane %v1061, %v1067
      %v1069 = vcombine.low %v999, %v999
      %v1071 = vunpack.c.l.s4 1983009808
      %v1072 = vunpack.c.0.s8 %v1071
      %v1073 = vlaneseq
      %v1074 = vshrl.u32 %v1073, 7
      %v1075 = vsub.s32 %v1072, %v1074
      %v1076 = vrot.slane %v1069, %v1075
      %v1077 = vcombine.low %v1000, %v1000
      %v1079 = vunpack.c.l.s4 1983009808
      %v1080 = vunpack.c.0.s8 %v1079
      %v1081 = vlaneseq
      %v1082 = vshrl.u32 %v1081, 7
      %v1083 = vsub.s32 %v1080, %v1082
      %v1084 = vrot.slane %v1077, %v1083
      %v1085 = vcombine.low %v1001, %v1001
      %v1087 = vunpack.c.l.s4 1983009808
      %v1088 = vunpack.c.0.s8 %v1087
      %v1089 = vlaneseq
      %v1090 = vshrl.u32 %v1089, 7
      %v1091 = vsub.s32 %v1088, %v1090
      %v1092 = vrot.slane %v1085, %v1091
      %v1093 = vcombine.low %v1002, %v1002
      %v1095 = vunpack.c.l.s4 1983009808
      %v1096 = vunpack.c.0.s8 %v1095
      %v1097 = vlaneseq
      %v1098 = vshrl.u32 %v1097, 7
      %v1099 = vsub.s32 %v1096, %v1098
      %v1100 = vrot.slane %v1093, %v1099
      %v1101 = vcombine.low %v1003, %v1003
      %v1103 = vunpack.c.l.s4 1983009808
      %v1104 = vunpack.c.0.s8 %v1103
      %v1105 = vlaneseq
      %v1106 = vshrl.u32 %v1105, 7
      %v1107 = vsub.s32 %v1104, %v1106
      %v1108 = vrot.slane %v1101, %v1107
      %v1109 = vcombine.low %v1004, %v1004
      %v1111 = vunpack.c.l.s4 1983009808
      %v1112 = vunpack.c.0.s8 %v1111
      %v1113 = vlaneseq
      %v1114 = vshrl.u32 %v1113, 7
      %v1115 = vsub.s32 %v1112, %v1114
      %v1116 = vrot.slane %v1109, %v1115
      %v1117 = vcombine.low %v1005, %v1005
      %v1119 = vunpack.c.l.s4 1983009808
      %v1120 = vunpack.c.0.s8 %v1119
      %v1121 = vlaneseq
      %v1122 = vshrl.u32 %v1121, 7
      %v1123 = vsub.s32 %v1120, %v1122
      %v1124 = vrot.slane %v1117, %v1123
      %v1125 = vcombine.low %v1006, %v1006
      %v1127 = vunpack.c.l.s4 1983009808
      %v1128 = vunpack.c.0.s8 %v1127
      %v1129 = vlaneseq
      %v1130 = vshrl.u32 %v1129, 7
      %v1131 = vsub.s32 %v1128, %v1130
      %v1132 = vrot.slane %v1125, %v1131
      %1133 = vrot.lane.b32.xlu0 %v1028, 126
      %v1134 = vpop.permute.xlu0 %1133
      %1135 = vrot.lane.b32.xlu0 %v1036, 126
      %v1136 = vpop.permute.xlu0 %1135
      %1137 = vrot.lane.b32.xlu0 %v1044, 126
      %v1138 = vpop.permute.xlu0 %1137
      %1139 = vrot.lane.b32.xlu0 %v1052, 126
      %v1140 = vpop.permute.xlu0 %1139
      %1141 = vrot.lane.b32.xlu0 %v1060, 126
      %v1142 = vpop.permute.xlu0 %1141
      %1143 = vrot.lane.b32.xlu0 %v1068, 126
      %v1144 = vpop.permute.xlu0 %1143
      %1145 = vrot.lane.b32.xlu0 %v1076, 126
      %v1146 = vpop.permute.xlu0 %1145
      %1147 = vrot.lane.b32.xlu0 %v1084, 126
      %v1148 = vpop.permute.xlu0 %1147
      %1149 = vrot.lane.b32.xlu0 %v1092, 126
      %v1150 = vpop.permute.xlu0 %1149
      %1151 = vrot.lane.b32.xlu0 %v1100, 126
      %v1152 = vpop.permute.xlu0 %1151
      %1153 = vrot.lane.b32.xlu0 %v1108, 126
      %v1154 = vpop.permute.xlu0 %1153
      %1155 = vrot.lane.b32.xlu0 %v1116, 126
      %v1156 = vpop.permute.xlu0 %1155
      %1157 = vrot.lane.b32.xlu0 %v1124, 126
      %v1158 = vpop.permute.xlu0 %1157
      %1159 = vrot.lane.b32.xlu0 %v1132, 126
      %v1160 = vpop.permute.xlu0 %1159
      %1175 = vst.msk [vmem:[#allocation2 + $0x8] sm:$0xc] %vm443, %v1134
      %1176 = vst.msk [vmem:[#allocation2 + $0x1c] sm:$0xc] %vm443, %v1136
      %1177 = vst.msk [vmem:[#allocation2 + $0x30] sm:$0xc] %vm443, %v1138
      %1178 = vst.msk [vmem:[#allocation2 + $0x44] sm:$0xc] %vm443, %v1140
      %1179 = vst.msk [vmem:[#allocation2 + $0x58] sm:$0xc] %vm443, %v1142
      %1180 = vst.msk [vmem:[#allocation2 + $0x6c] sm:$0xc] %vm443, %v1144
      %1181 = vst.msk [vmem:[#allocation2 + $0x80] sm:$0xc] %vm443, %v1146
      %1182 = vst.msk [vmem:[#allocation2 + $0x94] sm:$0xc] %vm443, %v1148
      %1183 = vst.msk [vmem:[#allocation2 + $0xa8] sm:$0xc] %vm443, %v1150
      %1184 = vst.msk [vmem:[#allocation2 + $0xbc] sm:$0xc] %vm443, %v1152
      %1185 = vst.msk [vmem:[#allocation2 + $0xd0] sm:$0xc] %vm443, %v1154
      %1186 = vst.msk [vmem:[#allocation2 + $0xe4] sm:$0xc] %vm443, %v1156
      %1187 = vst.msk [vmem:[#allocation2 + $0xf8] sm:$0xc] %vm443, %v1158
      %1188 = vst.msk [vmem:[#allocation2 + $0x10c] sm:$0xc] %vm443, %v1160
      %s1189 = sadd.s32 %s229, 2
      %s1190 = smul.addr %s1189, 2
      %s1191 = scalar_lea.vmem %s209, %s1190
      %v1192 = vld [vmem:[%s1191] sm:$0x3]
      %v1193 = vld [vmem:[%s1191 + $0x2] sm:$0x3]
      %v1194 = vld [vmem:[%s1191 + $0x4] sm:$0x3]
      %v1195 = vld [vmem:[%s1191 + $0x6] sm:$0x3]
      %v1196 = vld [vmem:[%s1191 + $0x8] sm:$0x3]
      %v1197 = vld [vmem:[%s1191 + $0xa] sm:$0x3]
      %v1198 = vld [vmem:[%s1191 + $0xc] sm:$0x3]
      %v1199 = vld [vmem:[%s1191 + $0xe] sm:$0x3]
      %v1200 = vld [vmem:[%s1191 + $0x10] sm:$0x3]
      %v1201 = vld [vmem:[%s1191 + $0x12] sm:$0x3]
      %v1202 = vld [vmem:[%s1191 + $0x14] sm:$0x3]
      %v1203 = vld [vmem:[%s1191 + $0x16] sm:$0x3]
      %v1204 = vld [vmem:[%s1191 + $0x18] sm:$0x3]
      %v1205 = vld [vmem:[%s1191 + $0x1a] sm:$0x3]
      %1206 = vst.msk [vmem:[#allocation2 + $0xc] sm:$0x3] %vm246, %v1192
      %1207 = vst.msk [vmem:[#allocation2 + $0x20] sm:$0x3] %vm246, %v1193
      %1208 = vst.msk [vmem:[#allocation2 + $0x34] sm:$0x3] %vm246, %v1194
      %1209 = vst.msk [vmem:[#allocation2 + $0x48] sm:$0x3] %vm246, %v1195
      %1210 = vst.msk [vmem:[#allocation2 + $0x5c] sm:$0x3] %vm246, %v1196
      %1211 = vst.msk [vmem:[#allocation2 + $0x70] sm:$0x3] %vm246, %v1197
      %1212 = vst.msk [vmem:[#allocation2 + $0x84] sm:$0x3] %vm246, %v1198
      %1213 = vst.msk [vmem:[#allocation2 + $0x98] sm:$0x3] %vm246, %v1199
      %1214 = vst.msk [vmem:[#allocation2 + $0xac] sm:$0x3] %vm246, %v1200
      %1215 = vst.msk [vmem:[#allocation2 + $0xc0] sm:$0x3] %vm246, %v1201
      %1216 = vst.msk [vmem:[#allocation2 + $0xd4] sm:$0x3] %vm246, %v1202
      %1217 = vst.msk [vmem:[#allocation2 + $0xe8] sm:$0x3] %vm246, %v1203
      %1218 = vst.msk [vmem:[#allocation2 + $0xfc] sm:$0x3] %vm246, %v1204
      %1219 = vst.msk [vmem:[#allocation2 + $0x110] sm:$0x3] %vm246, %v1205
      %v1220 = vld [vmem:[%s1191] sm:$0x3]
      %v1221 = vld [vmem:[%s1191 + $0x2] sm:$0x3]
      %v1222 = vld [vmem:[%s1191 + $0x4] sm:$0x3]
      %v1223 = vld [vmem:[%s1191 + $0x6] sm:$0x3]
      %v1224 = vld [vmem:[%s1191 + $0x8] sm:$0x3]
      %v1225 = vld [vmem:[%s1191 + $0xa] sm:$0x3]
      %v1226 = vld [vmem:[%s1191 + $0xc] sm:$0x3]
      %v1227 = vld [vmem:[%s1191 + $0xe] sm:$0x3]
      %v1228 = vld [vmem:[%s1191 + $0x10] sm:$0x3]
      %v1229 = vld [vmem:[%s1191 + $0x12] sm:$0x3]
      %v1230 = vld [vmem:[%s1191 + $0x14] sm:$0x3]
      %v1231 = vld [vmem:[%s1191 + $0x16] sm:$0x3]
      %v1232 = vld [vmem:[%s1191 + $0x18] sm:$0x3]
      %v1233 = vld [vmem:[%s1191 + $0x1a] sm:$0x3]
      %v1248 = vcombine.low %v1220, %v1220
      %v1250 = vunpack.c.l.s4 1983009808
      %v1251 = vunpack.c.0.s8 %v1250
      %v1252 = vlaneseq
      %v1253 = vshrl.u32 %v1252, 7
      %v1254 = vsub.s32 %v1251, %v1253
      %v1255 = vrot.slane %v1248, %v1254
      %v1256 = vcombine.low %v1221, %v1221
      %v1258 = vunpack.c.l.s4 1983009808
      %v1259 = vunpack.c.0.s8 %v1258
      %v1260 = vlaneseq
      %v1261 = vshrl.u32 %v1260, 7
      %v1262 = vsub.s32 %v1259, %v1261
      %v1263 = vrot.slane %v1256, %v1262
      %v1264 = vcombine.low %v1222, %v1222
      %v1266 = vunpack.c.l.s4 1983009808
      %v1267 = vunpack.c.0.s8 %v1266
      %v1268 = vlaneseq
      %v1269 = vshrl.u32 %v1268, 7
      %v1270 = vsub.s32 %v1267, %v1269
      %v1271 = vrot.slane %v1264, %v1270
      %v1272 = vcombine.low %v1223, %v1223
      %v1274 = vunpack.c.l.s4 1983009808
      %v1275 = vunpack.c.0.s8 %v1274
      %v1276 = vlaneseq
      %v1277 = vshrl.u32 %v1276, 7
      %v1278 = vsub.s32 %v1275, %v1277
      %v1279 = vrot.slane %v1272, %v1278
      %v1280 = vcombine.low %v1224, %v1224
      %v1282 = vunpack.c.l.s4 1983009808
      %v1283 = vunpack.c.0.s8 %v1282
      %v1284 = vlaneseq
      %v1285 = vshrl.u32 %v1284, 7
      %v1286 = vsub.s32 %v1283, %v1285
      %v1287 = vrot.slane %v1280, %v1286
      %v1288 = vcombine.low %v1225, %v1225
      %v1290 = vunpack.c.l.s4 1983009808
      %v1291 = vunpack.c.0.s8 %v1290
      %v1292 = vlaneseq
      %v1293 = vshrl.u32 %v1292, 7
      %v1294 = vsub.s32 %v1291, %v1293
      %v1295 = vrot.slane %v1288, %v1294
      %v1296 = vcombine.low %v1226, %v1226
      %v1298 = vunpack.c.l.s4 1983009808
      %v1299 = vunpack.c.0.s8 %v1298
      %v1300 = vlaneseq
      %v1301 = vshrl.u32 %v1300, 7
      %v1302 = vsub.s32 %v1299, %v1301
      %v1303 = vrot.slane %v1296, %v1302
      %v1304 = vcombine.low %v1227, %v1227
      %v1306 = vunpack.c.l.s4 1983009808
      %v1307 = vunpack.c.0.s8 %v1306
      %v1308 = vlaneseq
      %v1309 = vshrl.u32 %v1308, 7
      %v1310 = vsub.s32 %v1307, %v1309
      %v1311 = vrot.slane %v1304, %v1310
      %v1312 = vcombine.low %v1228, %v1228
      %v1314 = vunpack.c.l.s4 1983009808
      %v1315 = vunpack.c.0.s8 %v1314
      %v1316 = vlaneseq
      %v1317 = vshrl.u32 %v1316, 7
      %v1318 = vsub.s32 %v1315, %v1317
      %v1319 = vrot.slane %v1312, %v1318
      %v1320 = vcombine.low %v1229, %v1229
      %v1322 = vunpack.c.l.s4 1983009808
      %v1323 = vunpack.c.0.s8 %v1322
      %v1324 = vlaneseq
      %v1325 = vshrl.u32 %v1324, 7
      %v1326 = vsub.s32 %v1323, %v1325
      %v1327 = vrot.slane %v1320, %v1326
      %v1328 = vcombine.low %v1230, %v1230
      %v1330 = vunpack.c.l.s4 1983009808
      %v1331 = vunpack.c.0.s8 %v1330
      %v1332 = vlaneseq
      %v1333 = vshrl.u32 %v1332, 7
      %v1334 = vsub.s32 %v1331, %v1333
      %v1335 = vrot.slane %v1328, %v1334
      %v1336 = vcombine.low %v1231, %v1231
      %v1338 = vunpack.c.l.s4 1983009808
      %v1339 = vunpack.c.0.s8 %v1338
      %v1340 = vlaneseq
      %v1341 = vshrl.u32 %v1340, 7
      %v1342 = vsub.s32 %v1339, %v1341
      %v1343 = vrot.slane %v1336, %v1342
      %v1344 = vcombine.low %v1232, %v1232
      %v1346 = vunpack.c.l.s4 1983009808
      %v1347 = vunpack.c.0.s8 %v1346
      %v1348 = vlaneseq
      %v1349 = vshrl.u32 %v1348, 7
      %v1350 = vsub.s32 %v1347, %v1349
      %v1351 = vrot.slane %v1344, %v1350
      %v1352 = vcombine.low %v1233, %v1233
      %v1354 = vunpack.c.l.s4 1983009808
      %v1355 = vunpack.c.0.s8 %v1354
      %v1356 = vlaneseq
      %v1357 = vshrl.u32 %v1356, 7
      %v1358 = vsub.s32 %v1355, %v1357
      %v1359 = vrot.slane %v1352, %v1358
      %1360 = vrot.lane.b32.xlu0 %v1255, 127
      %v1361 = vpop.permute.xlu0 %1360
      %1362 = vrot.lane.b32.xlu0 %v1263, 127
      %v1363 = vpop.permute.xlu0 %1362
      %1364 = vrot.lane.b32.xlu0 %v1271, 127
      %v1365 = vpop.permute.xlu0 %1364
      %1366 = vrot.lane.b32.xlu0 %v1279, 127
      %v1367 = vpop.permute.xlu0 %1366
      %1368 = vrot.lane.b32.xlu0 %v1287, 127
      %v1369 = vpop.permute.xlu0 %1368
      %1370 = vrot.lane.b32.xlu0 %v1295, 127
      %v1371 = vpop.permute.xlu0 %1370
      %1372 = vrot.lane.b32.xlu0 %v1303, 127
      %v1373 = vpop.permute.xlu0 %1372
      %1374 = vrot.lane.b32.xlu0 %v1311, 127
      %v1375 = vpop.permute.xlu0 %1374
      %1376 = vrot.lane.b32.xlu0 %v1319, 127
      %v1377 = vpop.permute.xlu0 %1376
      %1378 = vrot.lane.b32.xlu0 %v1327, 127
      %v1379 = vpop.permute.xlu0 %1378
      %1380 = vrot.lane.b32.xlu0 %v1335, 127
      %v1381 = vpop.permute.xlu0 %1380
      %1382 = vrot.lane.b32.xlu0 %v1343, 127
      %v1383 = vpop.permute.xlu0 %1382
      %1384 = vrot.lane.b32.xlu0 %v1351, 127
      %v1385 = vpop.permute.xlu0 %1384
      %1386 = vrot.lane.b32.xlu0 %v1359, 127
      %v1387 = vpop.permute.xlu0 %1386
      %1402 = vst.msk [vmem:[#allocation2 + $0xc] sm:$0xc] %vm443, %v1361
      %1403 = vst.msk [vmem:[#allocation2 + $0x20] sm:$0xc] %vm443, %v1363
      %1404 = vst.msk [vmem:[#allocation2 + $0x34] sm:$0xc] %vm443, %v1365
      %1405 = vst.msk [vmem:[#allocation2 + $0x48] sm:$0xc] %vm443, %v1367
      %1406 = vst.msk [vmem:[#allocation2 + $0x5c] sm:$0xc] %vm443, %v1369
      %1407 = vst.msk [vmem:[#allocation2 + $0x70] sm:$0xc] %vm443, %v1371
      %1408 = vst.msk [vmem:[#allocation2 + $0x84] sm:$0xc] %vm443, %v1373
      %1409 = vst.msk [vmem:[#allocation2 + $0x98] sm:$0xc] %vm443, %v1375
      %1410 = vst.msk [vmem:[#allocation2 + $0xac] sm:$0xc] %vm443, %v1377
      %1411 = vst.msk [vmem:[#allocation2 + $0xc0] sm:$0xc] %vm443, %v1379
      %1412 = vst.msk [vmem:[#allocation2 + $0xd4] sm:$0xc] %vm443, %v1381
      %1413 = vst.msk [vmem:[#allocation2 + $0xe8] sm:$0xc] %vm443, %v1383
      %1414 = vst.msk [vmem:[#allocation2 + $0xfc] sm:$0xc] %vm443, %v1385
      %1415 = vst.msk [vmem:[#allocation2 + $0x110] sm:$0xc] %vm443, %v1387
      %v1416 = vld [vmem:[%s1191] sm:$0x3]
      %v1417 = vld [vmem:[%s1191 + $0x2] sm:$0x3]
      %v1418 = vld [vmem:[%s1191 + $0x4] sm:$0x3]
      %v1419 = vld [vmem:[%s1191 + $0x6] sm:$0x3]
      %v1420 = vld [vmem:[%s1191 + $0x8] sm:$0x3]
      %v1421 = vld [vmem:[%s1191 + $0xa] sm:$0x3]
      %v1422 = vld [vmem:[%s1191 + $0xc] sm:$0x3]
      %v1423 = vld [vmem:[%s1191 + $0xe] sm:$0x3]
      %v1424 = vld [vmem:[%s1191 + $0x10] sm:$0x3]
      %v1425 = vld [vmem:[%s1191 + $0x12] sm:$0x3]
      %v1426 = vld [vmem:[%s1191 + $0x14] sm:$0x3]
      %v1427 = vld [vmem:[%s1191 + $0x16] sm:$0x3]
      %v1428 = vld [vmem:[%s1191 + $0x18] sm:$0x3]
      %v1429 = vld [vmem:[%s1191 + $0x1a] sm:$0x3]
      %v1445 = vunpack.c.l.s4 1983009808
      %v1446 = vunpack.c.0.s8 %v1445
      %v1447 = vlaneseq
      %v1448 = vshrl.u32 %v1447, 7
      %v1449 = vsub.s32 %v1446, %v1448
      %v1450 = vrot.slane %v1416, %v1449
      %v1452 = vunpack.c.l.s4 1983009808
      %v1453 = vunpack.c.0.s8 %v1452
      %v1454 = vlaneseq
      %v1455 = vshrl.u32 %v1454, 7
      %v1456 = vsub.s32 %v1453, %v1455
      %v1457 = vrot.slane %v1417, %v1456
      %v1459 = vunpack.c.l.s4 1983009808
      %v1460 = vunpack.c.0.s8 %v1459
      %v1461 = vlaneseq
      %v1462 = vshrl.u32 %v1461, 7
      %v1463 = vsub.s32 %v1460, %v1462
      %v1464 = vrot.slane %v1418, %v1463
      %v1466 = vunpack.c.l.s4 1983009808
      %v1467 = vunpack.c.0.s8 %v1466
      %v1468 = vlaneseq
      %v1469 = vshrl.u32 %v1468, 7
      %v1470 = vsub.s32 %v1467, %v1469
      %v1471 = vrot.slane %v1419, %v1470
      %v1473 = vunpack.c.l.s4 1983009808
      %v1474 = vunpack.c.0.s8 %v1473
      %v1475 = vlaneseq
      %v1476 = vshrl.u32 %v1475, 7
      %v1477 = vsub.s32 %v1474, %v1476
      %v1478 = vrot.slane %v1420, %v1477
      %v1480 = vunpack.c.l.s4 1983009808
      %v1481 = vunpack.c.0.s8 %v1480
      %v1482 = vlaneseq
      %v1483 = vshrl.u32 %v1482, 7
      %v1484 = vsub.s32 %v1481, %v1483
      %v1485 = vrot.slane %v1421, %v1484
      %v1487 = vunpack.c.l.s4 1983009808
      %v1488 = vunpack.c.0.s8 %v1487
      %v1489 = vlaneseq
      %v1490 = vshrl.u32 %v1489, 7
      %v1491 = vsub.s32 %v1488, %v1490
      %v1492 = vrot.slane %v1422, %v1491
      %v1494 = vunpack.c.l.s4 1983009808
      %v1495 = vunpack.c.0.s8 %v1494
      %v1496 = vlaneseq
      %v1497 = vshrl.u32 %v1496, 7
      %v1498 = vsub.s32 %v1495, %v1497
      %v1499 = vrot.slane %v1423, %v1498
      %v1501 = vunpack.c.l.s4 1983009808
      %v1502 = vunpack.c.0.s8 %v1501
      %v1503 = vlaneseq
      %v1504 = vshrl.u32 %v1503, 7
      %v1505 = vsub.s32 %v1502, %v1504
      %v1506 = vrot.slane %v1424, %v1505
      %v1508 = vunpack.c.l.s4 1983009808
      %v1509 = vunpack.c.0.s8 %v1508
      %v1510 = vlaneseq
      %v1511 = vshrl.u32 %v1510, 7
      %v1512 = vsub.s32 %v1509, %v1511
      %v1513 = vrot.slane %v1425, %v1512
      %v1515 = vunpack.c.l.s4 1983009808
      %v1516 = vunpack.c.0.s8 %v1515
      %v1517 = vlaneseq
      %v1518 = vshrl.u32 %v1517, 7
      %v1519 = vsub.s32 %v1516, %v1518
      %v1520 = vrot.slane %v1426, %v1519
      %v1522 = vunpack.c.l.s4 1983009808
      %v1523 = vunpack.c.0.s8 %v1522
      %v1524 = vlaneseq
      %v1525 = vshrl.u32 %v1524, 7
      %v1526 = vsub.s32 %v1523, %v1525
      %v1527 = vrot.slane %v1427, %v1526
      %v1529 = vunpack.c.l.s4 1983009808
      %v1530 = vunpack.c.0.s8 %v1529
      %v1531 = vlaneseq
      %v1532 = vshrl.u32 %v1531, 7
      %v1533 = vsub.s32 %v1530, %v1532
      %v1534 = vrot.slane %v1428, %v1533
      %v1536 = vunpack.c.l.s4 1983009808
      %v1537 = vunpack.c.0.s8 %v1536
      %v1538 = vlaneseq
      %v1539 = vshrl.u32 %v1538, 7
      %v1540 = vsub.s32 %v1537, %v1539
      %v1541 = vrot.slane %v1429, %v1540
      %1542 = vrot.lane.b32.xlu0 %v1450, 126
      %v1543 = vpop.permute.xlu0 %1542
      %1544 = vrot.lane.b32.xlu0 %v1457, 126
      %v1545 = vpop.permute.xlu0 %1544
      %1546 = vrot.lane.b32.xlu0 %v1464, 126
      %v1547 = vpop.permute.xlu0 %1546
      %1548 = vrot.lane.b32.xlu0 %v1471, 126
      %v1549 = vpop.permute.xlu0 %1548
      %1550 = vrot.lane.b32.xlu0 %v1478, 126
      %v1551 = vpop.permute.xlu0 %1550
      %1552 = vrot.lane.b32.xlu0 %v1485, 126
      %v1553 = vpop.permute.xlu0 %1552
      %1554 = vrot.lane.b32.xlu0 %v1492, 126
      %v1555 = vpop.permute.xlu0 %1554
      %1556 = vrot.lane.b32.xlu0 %v1499, 126
      %v1557 = vpop.permute.xlu0 %1556
      %1558 = vrot.lane.b32.xlu0 %v1506, 126
      %v1559 = vpop.permute.xlu0 %1558
      %1560 = vrot.lane.b32.xlu0 %v1513, 126
      %v1561 = vpop.permute.xlu0 %1560
      %1562 = vrot.lane.b32.xlu0 %v1520, 126
      %v1563 = vpop.permute.xlu0 %1562
      %1564 = vrot.lane.b32.xlu0 %v1527, 126
      %v1565 = vpop.permute.xlu0 %1564
      %1566 = vrot.lane.b32.xlu0 %v1534, 126
      %v1567 = vpop.permute.xlu0 %1566
      %1568 = vrot.lane.b32.xlu0 %v1541, 126
      %v1569 = vpop.permute.xlu0 %1568
      %1584 = vst.msk [vmem:[#allocation2 + $0x10] sm:$0x3] %vm246, %v1543
      %1585 = vst.msk [vmem:[#allocation2 + $0x24] sm:$0x3] %vm246, %v1545
      %1586 = vst.msk [vmem:[#allocation2 + $0x38] sm:$0x3] %vm246, %v1547
      %1587 = vst.msk [vmem:[#allocation2 + $0x4c] sm:$0x3] %vm246, %v1549
      %1588 = vst.msk [vmem:[#allocation2 + $0x60] sm:$0x3] %vm246, %v1551
      %1589 = vst.msk [vmem:[#allocation2 + $0x74] sm:$0x3] %vm246, %v1553
      %1590 = vst.msk [vmem:[#allocation2 + $0x88] sm:$0x3] %vm246, %v1555
      %1591 = vst.msk [vmem:[#allocation2 + $0x9c] sm:$0x3] %vm246, %v1557
      %1592 = vst.msk [vmem:[#allocation2 + $0xb0] sm:$0x3] %vm246, %v1559
      %1593 = vst.msk [vmem:[#allocation2 + $0xc4] sm:$0x3] %vm246, %v1561
      %1594 = vst.msk [vmem:[#allocation2 + $0xd8] sm:$0x3] %vm246, %v1563
      %1595 = vst.msk [vmem:[#allocation2 + $0xec] sm:$0x3] %vm246, %v1565
      %1596 = vst.msk [vmem:[#allocation2 + $0x100] sm:$0x3] %vm246, %v1567
      %1597 = vst.msk [vmem:[#allocation2 + $0x114] sm:$0x3] %vm246, %v1569
      %v1598 = vld [vmem:[%s213] sm:$0xf]
      %v1599 = vld [vmem:[%s217] sm:$0xff]
      %v1600 = vld [vmem:[#allocation2] sm:$0xf]
      %v1601 = vld [vmem:[#allocation2 + $0x4] sm:$0xf]
      %v1602 = vld [vmem:[#allocation2 + $0x8] sm:$0xf]
      %v1603 = vld [vmem:[#allocation2 + $0xc] sm:$0xf]
      %v1604 = vld [vmem:[#allocation2 + $0x10] sm:$0x3]
      %1606 = vset.pattern.permute.xlu0 0
      %1607 = vperm.xlu0 %1606, %v1599
      %v1608 = vpop.permute.xlu0 %1607
      %v1615 = vunpack.c.l.b16 %v1600
      %v1616 = vunpack.c.l.b16 %v1601
      %v1617 = vunpack.c.l.b16 %v1602
      %v1618 = vunpack.c.l.b16 %v1603
      %v1619 = vunpack.c.l.b16 %v1604
      %v1620 = vpack.c.b16 %v1616, %v1615
      %v1621 = vpack.c.b16 %v1618, %v1617
      %v1622 = vpack.c.b16 %v1619, %v1619
      %vm1625 = vcmask 293888
      %v1627 = vsel %vm1625, %v1598, 0
      %vm1629 = vcmask 1041408
      %v1631 = vsel %vm1629, %v1622, 0
      %1633 = vmatprep.subr.bf16.mxu0 0
      %1634 = vmatpush1.bf16.msra.mxu0 %v1620
      %1635 = vmatprep.subr.bf16.mxu0 0
      %1636 = vmatpush1.bf16.msra.mxu0 %v1621
      %1637 = vmatprep.subr.bf16.mxu0 0
      %1638 = vmatpush1.bf16.msra.mxu0 %v1631
      %1639 = vmatprep.subr.bf16.mxu0 0
      %1640 = vmatpush1.bf16.msra.mxu0 0
      %1641 = vmatprep.subr.bf16.mxu0 0
      %1642 = vmatpush1.bf16.msra.mxu0 0
      %1643 = vmatprep.subr.bf16.mxu0 0
      %1644 = vmatpush1.bf16.msra.mxu0 0
      %1645 = vmatprep.subr.bf16.mxu0 0
      %1646 = vmatpush1.bf16.msra.mxu0 0
      %1647 = vmatprep.subr.bf16.mxu0 0
      %1648 = vmatpush1.bf16.msra.mxu0 0
      %1649 = vmatprep.subr.bf16.mxu0 0
      %1650 = vmatpush1.bf16.msra.mxu0 0
      %1651 = vmatprep.subr.bf16.mxu0 0
      %1652 = vmatpush1.bf16.msra.mxu0 0
      %1653 = vmatprep.subr.bf16.mxu0 0
      %1654 = vmatpush1.bf16.msra.mxu0 0
      %1655 = vmatprep.subr.bf16.mxu0 0
      %1656 = vmatpush1.bf16.msra.mxu0 0
      %1657 = vmatprep.subr.bf16.mxu0 0
      %1658 = vmatpush1.bf16.msra.mxu0 0
      %1659 = vmatprep.subr.bf16.mxu0 0
      %1660 = vmatpush1.bf16.msra.mxu0 0
      %1661 = vmatprep.subr.bf16.mxu0 0
      %1662 = vmatpush1.bf16.msra.mxu0 0
      %1663 = vmatprep.subr.bf16.mxu0 0
      %1664 = vmatpush1.bf16.msra.mxu0 0
      %1665 = vmatprep.mubr.bf16.mxu0 0
      %1666 = vmatmul.mubr.bf16.gmra.mrb[0].mxu0 %v1627
      %v1667 = vpop.f32.mrb[0].mxu0
      %v1668 = vadd.f32 %v1608, %v1667
      %v1669 = vpop.f32.mrb[0].mxu0
      %v1670 = vpop.f32.mrb[0].mxu0
      %v1671 = vpop.f32.mrb[0].mxu0
      %1672 = vdwg.mxu0
      %vm1673 = vcmask 113664
      %1674 = vst.msk [vmem:[%s226] sm:$0xff] %vm1673, %v1668
      %s1675 = scalar_lea.vmem [#allocation2], 20
      %v1676 = vld [vmem:[%s1675] sm:$0xf]
      %v1677 = vld [vmem:[%s1675 + $0x4] sm:$0xf]
      %v1678 = vld [vmem:[%s1675 + $0x8] sm:$0xf]
      %v1679 = vld [vmem:[%s1675 + $0xc] sm:$0xf]
      %v1680 = vld [vmem:[%s1675 + $0x10] sm:$0x3]
      %v1686 = vunpack.c.l.b16 %v1676
      %v1687 = vunpack.c.l.b16 %v1677
      %v1688 = vunpack.c.l.b16 %v1678
      %v1689 = vunpack.c.l.b16 %v1679
      %v1690 = vunpack.c.l.b16 %v1680
      %v1691 = vpack.c.b16 %v1687, %v1686
      %v1692 = vpack.c.b16 %v1689, %v1688
      %v1693 = vpack.c.b16 %v1690, %v1690
      %v1697 = vsel %vm1629, %v1693, 0
      %1699 = vmatprep.subr.bf16.mxu0 0
      %1700 = vmatpush1.bf16.msra.mxu0 %v1691
      %1701 = vmatprep.subr.bf16.mxu0 0
      %1702 = vmatpush1.bf16.msra.mxu0 %v1692
      %1703 = vmatprep.subr.bf16.mxu0 0
      %1704 = vmatpush1.bf16.msra.mxu0 %v1697
      %1705 = vmatprep.subr.bf16.mxu0 0
      %1706 = vmatpush1.bf16.msra.mxu0 0
      %1707 = vmatprep.subr.bf16.mxu0 0
      %1708 = vmatpush1.bf16.msra.mxu0 0
      %1709 = vmatprep.subr.bf16.mxu0 0
      %1710 = vmatpush1.bf16.msra.mxu0 0
      %1711 = vmatprep.subr.bf16.mxu0 0
      %1712 = vmatpush1.bf16.msra.mxu0 0
      %1713 = vmatprep.subr.bf16.mxu0 0
      %1714 = vmatpush1.bf16.msra.mxu0 0
      %1715 = vmatprep.subr.bf16.mxu0 0
      %1716 = vmatpush1.bf16.msra.mxu0 0
      %1717 = vmatprep.subr.bf16.mxu0 0
      %1718 = vmatpush1.bf16.msra.mxu0 0
      %1719 = vmatprep.subr.bf16.mxu0 0
      %1720 = vmatpush1.bf16.msra.mxu0 0
      %1721 = vmatprep.subr.bf16.mxu0 0
      %1722 = vmatpush1.bf16.msra.mxu0 0
      %1723 = vmatprep.subr.bf16.mxu0 0
      %1724 = vmatpush1.bf16.msra.mxu0 0
      %1725 = vmatprep.subr.bf16.mxu0 0
      %1726 = vmatpush1.bf16.msra.mxu0 0
      %1727 = vmatprep.subr.bf16.mxu0 0
      %1728 = vmatpush1.bf16.msra.mxu0 0
      %1729 = vmatprep.subr.bf16.mxu0 0
      %1730 = vmatpush1.bf16.msra.mxu0 0
      %1731 = vmatprep.mubr.bf16.mxu0 0
      %1732 = vmatmul.mubr.bf16.gmra.mrb[0].mxu0 %v1627
      %v1733 = vpop.f32.mrb[0].mxu0
      %v1734 = vadd.f32 %v1608, %v1733
      %v1735 = vpop.f32.mrb[0].mxu0
      %v1736 = vpop.f32.mrb[0].mxu0
      %v1737 = vpop.f32.mrb[0].mxu0
      %1738 = vdwg.mxu0
      %s1739 = scalar_lea.vmem %s226, 8
      %1740 = vst.msk [vmem:[%s1739] sm:$0xff] %vm1673, %v1734
      %s1741 = scalar_lea.vmem [#allocation2], 40
      %v1742 = vld [vmem:[%s1741] sm:$0xf]
      %v1743 = vld [vmem:[%s1741 + $0x4] sm:$0xf]
      %v1744 = vld [vmem:[%s1741 + $0x8] sm:$0xf]
      %v1745 = vld [vmem:[%s1741 + $0xc] sm:$0xf]
      %v1746 = vld [vmem:[%s1741 + $0x10] sm:$0x3]
      %v1752 = vunpack.c.l.b16 %v1742
      %v1753 = vunpack.c.l.b16 %v1743
      %v1754 = vunpack.c.l.b16 %v1744
      %v1755 = vunpack.c.l.b16 %v1745
      %v1756 = vunpack.c.l.b16 %v1746
      %v1757 = vpack.c.b16 %v1753, %v1752
      %v1758 = vpack.c.b16 %v1755, %v1754
      %v1759 = vpack.c.b16 %v1756, %v1756
      %v1763 = vsel %vm1629, %v1759, 0
      %1765 = vmatprep.subr.bf16.mxu0 0
      %1766 = vmatpush1.bf16.msra.mxu0 %v1757
      %1767 = vmatprep.subr.bf16.mxu0 0
      %1768 = vmatpush1.bf16.msra.mxu0 %v1758
      %1769 = vmatprep.subr.bf16.mxu0 0
      %1770 = vmatpush1.bf16.msra.mxu0 %v1763
      %1771 = vmatprep.subr.bf16.mxu0 0
      %1772 = vmatpush1.bf16.msra.mxu0 0
      %1773 = vmatprep.subr.bf16.mxu0 0
      %1774 = vmatpush1.bf16.msra.mxu0 0
      %1775 = vmatprep.subr.bf16.mxu0 0
      %1776 = vmatpush1.bf16.msra.mxu0 0
      %1777 = vmatprep.subr.bf16.mxu0 0
      %1778 = vmatpush1.bf16.msra.mxu0 0
      %1779 = vmatprep.subr.bf16.mxu0 0
      %1780 = vmatpush1.bf16.msra.mxu0 0
      %1781 = vmatprep.subr.bf16.mxu0 0
      %1782 = vmatpush1.bf16.msra.mxu0 0
      %1783 = vmatprep.subr.bf16.mxu0 0
      %1784 = vmatpush1.bf16.msra.mxu0 0
      %1785 = vmatprep.subr.bf16.mxu0 0
      %1786 = vmatpush1.bf16.msra.mxu0 0
      %1787 = vmatprep.subr.bf16.mxu0 0
      %1788 = vmatpush1.bf16.msra.mxu0 0
      %1789 = vmatprep.subr.bf16.mxu0 0
      %1790 = vmatpush1.bf16.msra.mxu0 0
      %1791 = vmatprep.subr.bf16.mxu0 0
      %1792 = vmatpush1.bf16.msra.mxu0 0
      %1793 = vmatprep.subr.bf16.mxu0 0
      %1794 = vmatpush1.bf16.msra.mxu0 0
      %1795 = vmatprep.subr.bf16.mxu0 0
      %1796 = vmatpush1.bf16.msra.mxu0 0
      %1797 = vmatprep.mubr.bf16.mxu0 0
      %1798 = vmatmul.mubr.bf16.gmra.mrb[0].mxu0 %v1627
      %v1799 = vpop.f32.mrb[0].mxu0
      %v1800 = vadd.f32 %v1608, %v1799
      %v1801 = vpop.f32.mrb[0].mxu0
      %v1802 = vpop.f32.mrb[0].mxu0
      %v1803 = vpop.f32.mrb[0].mxu0
      %1804 = vdwg.mxu0
      %s1805 = scalar_lea.vmem %s226, 16
      %1806 = vst.msk [vmem:[%s1805] sm:$0xff] %vm1673, %v1800
      %s1807 = scalar_lea.vmem [#allocation2], 60
      %v1808 = vld [vmem:[%s1807] sm:$0xf]
      %v1809 = vld [vmem:[%s1807 + $0x4] sm:$0xf]
      %v1810 = vld [vmem:[%s1807 + $0x8] sm:$0xf]
      %v1811 = vld [vmem:[%s1807 + $0xc] sm:$0xf]
      %v1812 = vld [vmem:[%s1807 + $0x10] sm:$0x3]
      %v1818 = vunpack.c.l.b16 %v1808
      %v1819 = vunpack.c.l.b16 %v1809
      %v1820 = vunpack.c.l.b16 %v1810
      %v1821 = vunpack.c.l.b16 %v1811
      %v1822 = vunpack.c.l.b16 %v1812
      %v1823 = vpack.c.b16 %v1819, %v1818
      %v1824 = vpack.c.b16 %v1821, %v1820
      %v1825 = vpack.c.b16 %v1822, %v1822
      %v1829 = vsel %vm1629, %v1825, 0
      %1831 = vmatprep.subr.bf16.mxu0 0
      %1832 = vmatpush1.bf16.msra.mxu0 %v1823
      %1833 = vmatprep.subr.bf16.mxu0 0
      %1834 = vmatpush1.bf16.msra.mxu0 %v1824
      %1835 = vmatprep.subr.bf16.mxu0 0
      %1836 = vmatpush1.bf16.msra.mxu0 %v1829
      %1837 = vmatprep.subr.bf16.mxu0 0
      %1838 = vmatpush1.bf16.msra.mxu0 0
      %1839 = vmatprep.subr.bf16.mxu0 0
      %1840 = vmatpush1.bf16.msra.mxu0 0
      %1841 = vmatprep.subr.bf16.mxu0 0
      %1842 = vmatpush1.bf16.msra.mxu0 0
      %1843 = vmatprep.subr.bf16.mxu0 0
      %1844 = vmatpush1.bf16.msra.mxu0 0
      %1845 = vmatprep.subr.bf16.mxu0 0
      %1846 = vmatpush1.bf16.msra.mxu0 0
      %1847 = vmatprep.subr.bf16.mxu0 0
      %1848 = vmatpush1.bf16.msra.mxu0 0
      %1849 = vmatprep.subr.bf16.mxu0 0
      %1850 = vmatpush1.bf16.msra.mxu0 0
      %1851 = vmatprep.subr.bf16.mxu0 0
      %1852 = vmatpush1.bf16.msra.mxu0 0
      %1853 = vmatprep.subr.bf16.mxu0 0
      %1854 = vmatpush1.bf16.msra.mxu0 0
      %1855 = vmatprep.subr.bf16.mxu0 0
      %1856 = vmatpush1.bf16.msra.mxu0 0
      %1857 = vmatprep.subr.bf16.mxu0 0
      %1858 = vmatpush1.bf16.msra.mxu0 0
      %1859 = vmatprep.subr.bf16.mxu0 0
      %1860 = vmatpush1.bf16.msra.mxu0 0
      %1861 = vmatprep.subr.bf16.mxu0 0
      %1862 = vmatpush1.bf16.msra.mxu0 0
      %1863 = vmatprep.mubr.bf16.mxu0 0
      %1864 = vmatmul.mubr.bf16.gmra.mrb[0].mxu0 %v1627
      %v1865 = vpop.f32.mrb[0].mxu0
      %v1866 = vadd.f32 %v1608, %v1865
      %v1867 = vpop.f32.mrb[0].mxu0
      %v1868 = vpop.f32.mrb[0].mxu0
      %v1869 = vpop.f32.mrb[0].mxu0
      %1870 = vdwg.mxu0
      %s1871 = scalar_lea.vmem %s226, 24
      %1872 = vst.msk [vmem:[%s1871] sm:$0xff] %vm1673, %v1866
      %s1873 = scalar_lea.vmem [#allocation2], 80
      %v1874 = vld [vmem:[%s1873] sm:$0xf]
      %v1875 = vld [vmem:[%s1873 + $0x4] sm:$0xf]
      %v1876 = vld [vmem:[%s1873 + $0x8] sm:$0xf]
      %v1877 = vld [vmem:[%s1873 + $0xc] sm:$0xf]
      %v1878 = vld [vmem:[%s1873 + $0x10] sm:$0x3]
      %v1884 = vunpack.c.l.b16 %v1874
      %v1885 = vunpack.c.l.b16 %v1875
      %v1886 = vunpack.c.l.b16 %v1876
      %v1887 = vunpack.c.l.b16 %v1877
      %v1888 = vunpack.c.l.b16 %v1878
      %v1889 = vpack.c.b16 %v1885, %v1884
      %v1890 = vpack.c.b16 %v1887, %v1886
      %v1891 = vpack.c.b16 %v1888, %v1888
      %v1895 = vsel %vm1629, %v1891, 0
      %1897 = vmatprep.subr.bf16.mxu0 0
      %1898 = vmatpush1.bf16.msra.mxu0 %v1889
      %1899 = vmatprep.subr.bf16.mxu0 0
      %1900 = vmatpush1.bf16.msra.mxu0 %v1890
      %1901 = vmatprep.subr.bf16.mxu0 0
      %1902 = vmatpush1.bf16.msra.mxu0 %v1895
      %1903 = vmatprep.subr.bf16.mxu0 0
      %1904 = vmatpush1.bf16.msra.mxu0 0
      %1905 = vmatprep.subr.bf16.mxu0 0
      %1906 = vmatpush1.bf16.msra.mxu0 0
      %1907 = vmatprep.subr.bf16.mxu0 0
      %1908 = vmatpush1.bf16.msra.mxu0 0
      %1909 = vmatprep.subr.bf16.mxu0 0
      %1910 = vmatpush1.bf16.msra.mxu0 0
      %1911 = vmatprep.subr.bf16.mxu0 0
      %1912 = vmatpush1.bf16.msra.mxu0 0
      %1913 = vmatprep.subr.bf16.mxu0 0
      %1914 = vmatpush1.bf16.msra.mxu0 0
      %1915 = vmatprep.subr.bf16.mxu0 0
      %1916 = vmatpush1.bf16.msra.mxu0 0
      %1917 = vmatprep.subr.bf16.mxu0 0
      %1918 = vmatpush1.bf16.msra.mxu0 0
      %1919 = vmatprep.subr.bf16.mxu0 0
      %1920 = vmatpush1.bf16.msra.mxu0 0
      %1921 = vmatprep.subr.bf16.mxu0 0
      %1922 = vmatpush1.bf16.msra.mxu0 0
      %1923 = vmatprep.subr.bf16.mxu0 0
      %1924 = vmatpush1.bf16.msra.mxu0 0
      %1925 = vmatprep.subr.bf16.mxu0 0
      %1926 = vmatpush1.bf16.msra.mxu0 0
      %1927 = vmatprep.subr.bf16.mxu0 0
      %1928 = vmatpush1.bf16.msra.mxu0 0
      %1929 = vmatprep.mubr.bf16.mxu0 0
      %1930 = vmatmul.mubr.bf16.gmra.mrb[0].mxu0 %v1627
      %v1931 = vpop.f32.mrb[0].mxu0
      %v1932 = vadd.f32 %v1608, %v1931
      %v1933 = vpop.f32.mrb[0].mxu0
      %v1934 = vpop.f32.mrb[0].mxu0
      %v1935 = vpop.f32.mrb[0].mxu0
      %1936 = vdwg.mxu0
      %s1937 = scalar_lea.vmem %s226, 32
      %1938 = vst.msk [vmem:[%s1937] sm:$0xff] %vm1673, %v1932
      %s1939 = scalar_lea.vmem [#allocation2], 100
      %v1940 = vld [vmem:[%s1939] sm:$0xf]
      %v1941 = vld [vmem:[%s1939 + $0x4] sm:$0xf]
      %v1942 = vld [vmem:[%s1939 + $0x8] sm:$0xf]
      %v1943 = vld [vmem:[%s1939 + $0xc] sm:$0xf]
      %v1944 = vld [vmem:[%s1939 + $0x10] sm:$0x3]
      %v1950 = vunpack.c.l.b16 %v1940
      %v1951 = vunpack.c.l.b16 %v1941
      %v1952 = vunpack.c.l.b16 %v1942
      %v1953 = vunpack.c.l.b16 %v1943
      %v1954 = vunpack.c.l.b16 %v1944
      %v1955 = vpack.c.b16 %v1951, %v1950
      %v1956 = vpack.c.b16 %v1953, %v1952
      %v1957 = vpack.c.b16 %v1954, %v1954
      %v1961 = vsel %vm1629, %v1957, 0
      %1963 = vmatprep.subr.bf16.mxu0 0
      %1964 = vmatpush1.bf16.msra.mxu0 %v1955
      %1965 = vmatprep.subr.bf16.mxu0 0
      %1966 = vmatpush1.bf16.msra.mxu0 %v1956
      %1967 = vmatprep.subr.bf16.mxu0 0
      %1968 = vmatpush1.bf16.msra.mxu0 %v1961
      %1969 = vmatprep.subr.bf16.mxu0 0
      %1970 = vmatpush1.bf16.msra.mxu0 0
      %1971 = vmatprep.subr.bf16.mxu0 0
      %1972 = vmatpush1.bf16.msra.mxu0 0
      %1973 = vmatprep.subr.bf16.mxu0 0
      %1974 = vmatpush1.bf16.msra.mxu0 0
      %1975 = vmatprep.subr.bf16.mxu0 0
      %1976 = vmatpush1.bf16.msra.mxu0 0
      %1977 = vmatprep.subr.bf16.mxu0 0
      %1978 = vmatpush1.bf16.msra.mxu0 0
      %1979 = vmatprep.subr.bf16.mxu0 0
      %1980 = vmatpush1.bf16.msra.mxu0 0
      %1981 = vmatprep.subr.bf16.mxu0 0
      %1982 = vmatpush1.bf16.msra.mxu0 0
      %1983 = vmatprep.subr.bf16.mxu0 0
      %1984 = vmatpush1.bf16.msra.mxu0 0
      %1985 = vmatprep.subr.bf16.mxu0 0
      %1986 = vmatpush1.bf16.msra.mxu0 0
      %1987 = vmatprep.subr.bf16.mxu0 0
      %1988 = vmatpush1.bf16.msra.mxu0 0
      %1989 = vmatprep.subr.bf16.mxu0 0
      %1990 = vmatpush1.bf16.msra.mxu0 0
      %1991 = vmatprep.subr.bf16.mxu0 0
      %1992 = vmatpush1.bf16.msra.mxu0 0
      %1993 = vmatprep.subr.bf16.mxu0 0
      %1994 = vmatpush1.bf16.msra.mxu0 0
      %1995 = vmatprep.mubr.bf16.mxu0 0
      %1996 = vmatmul.mubr.bf16.gmra.mrb[0].mxu0 %v1627
      %v1997 = vpop.f32.mrb[0].mxu0
      %v1998 = vadd.f32 %v1608, %v1997
      %v1999 = vpop.f32.mrb[0].mxu0
      %v2000 = vpop.f32.mrb[0].mxu0
      %v2001 = vpop.f32.mrb[0].mxu0
      %2002 = vdwg.mxu0
      %s2003 = scalar_lea.vmem %s226, 40
      %2004 = vst.msk [vmem:[%s2003] sm:$0xff] %vm1673, %v1998
      %s2005 = scalar_lea.vmem [#allocation2], 120
      %v2006 = vld [vmem:[%s2005] sm:$0xf]
      %v2007 = vld [vmem:[%s2005 + $0x4] sm:$0xf]
      %v2008 = vld [vmem:[%s2005 + $0x8] sm:$0xf]
      %v2009 = vld [vmem:[%s2005 + $0xc] sm:$0xf]
      %v2010 = vld [vmem:[%s2005 + $0x10] sm:$0x3]
      %v2016 = vunpack.c.l.b16 %v2006
      %v2017 = vunpack.c.l.b16 %v2007
      %v2018 = vunpack.c.l.b16 %v2008
      %v2019 = vunpack.c.l.b16 %v2009
      %v2020 = vunpack.c.l.b16 %v2010
      %v2021 = vpack.c.b16 %v2017, %v2016
      %v2022 = vpack.c.b16 %v2019, %v2018
      %v2023 = vpack.c.b16 %v2020, %v2020
      %v2027 = vsel %vm1629, %v2023, 0
      %2029 = vmatprep.subr.bf16.mxu0 0
      %2030 = vmatpush1.bf16.msra.mxu0 %v2021
      %2031 = vmatprep.subr.bf16.mxu0 0
      %2032 = vmatpush1.bf16.msra.mxu0 %v2022
      %2033 = vmatprep.subr.bf16.mxu0 0
      %2034 = vmatpush1.bf16.msra.mxu0 %v2027
      %2035 = vmatprep.subr.bf16.mxu0 0
      %2036 = vmatpush1.bf16.msra.mxu0 0
      %2037 = vmatprep.subr.bf16.mxu0 0
      %2038 = vmatpush1.bf16.msra.mxu0 0
      %2039 = vmatprep.subr.bf16.mxu0 0
      %2040 = vmatpush1.bf16.msra.mxu0 0
      %2041 = vmatprep.subr.bf16.mxu0 0
      %2042 = vmatpush1.bf16.msra.mxu0 0
      %2043 = vmatprep.subr.bf16.mxu0 0
      %2044 = vmatpush1.bf16.msra.mxu0 0
      %2045 = vmatprep.subr.bf16.mxu0 0
      %2046 = vmatpush1.bf16.msra.mxu0 0
      %2047 = vmatprep.subr.bf16.mxu0 0
      %2048 = vmatpush1.bf16.msra.mxu0 0
      %2049 = vmatprep.subr.bf16.mxu0 0
      %2050 = vmatpush1.bf16.msra.mxu0 0
      %2051 = vmatprep.subr.bf16.mxu0 0
      %2052 = vmatpush1.bf16.msra.mxu0 0
      %2053 = vmatprep.subr.bf16.mxu0 0
      %2054 = vmatpush1.bf16.msra.mxu0 0
      %2055 = vmatprep.subr.bf16.mxu0 0
      %2056 = vmatpush1.bf16.msra.mxu0 0
      %2057 = vmatprep.subr.bf16.mxu0 0
      %2058 = vmatpush1.bf16.msra.mxu0 0
      %2059 = vmatprep.subr.bf16.mxu0 0
      %2060 = vmatpush1.bf16.msra.mxu0 0
      %2061 = vmatprep.mubr.bf16.mxu0 0
      %2062 = vmatmul.mubr.bf16.gmra.mrb[0].mxu0 %v1627
      %v2063 = vpop.f32.mrb[0].mxu0
      %v2064 = vadd.f32 %v1608, %v2063
      %v2065 = vpop.f32.mrb[0].mxu0
      %v2066 = vpop.f32.mrb[0].mxu0
      %v2067 = vpop.f32.mrb[0].mxu0
      %2068 = vdwg.mxu0
      %s2069 = scalar_lea.vmem %s226, 48
      %2070 = vst.msk [vmem:[%s2069] sm:$0xff] %vm1673, %v2064
      %s2071 = scalar_lea.vmem [#allocation2], 140
      %v2072 = vld [vmem:[%s2071] sm:$0xf]
      %v2073 = vld [vmem:[%s2071 + $0x4] sm:$0xf]
      %v2074 = vld [vmem:[%s2071 + $0x8] sm:$0xf]
      %v2075 = vld [vmem:[%s2071 + $0xc] sm:$0xf]
      %v2076 = vld [vmem:[%s2071 + $0x10] sm:$0x3]
      %v2082 = vunpack.c.l.b16 %v2072
      %v2083 = vunpack.c.l.b16 %v2073
      %v2084 = vunpack.c.l.b16 %v2074
      %v2085 = vunpack.c.l.b16 %v2075
      %v2086 = vunpack.c.l.b16 %v2076
      %v2087 = vpack.c.b16 %v2083, %v2082
      %v2088 = vpack.c.b16 %v2085, %v2084
      %v2089 = vpack.c.b16 %v2086, %v2086
      %v2093 = vsel %vm1629, %v2089, 0
      %2095 = vmatprep.subr.bf16.mxu0 0
      %2096 = vmatpush1.bf16.msra.mxu0 %v2087
      %2097 = vmatprep.subr.bf16.mxu0 0
      %2098 = vmatpush1.bf16.msra.mxu0 %v2088
      %2099 = vmatprep.subr.bf16.mxu0 0
      %2100 = vmatpush1.bf16.msra.mxu0 %v2093
      %2101 = vmatprep.subr.bf16.mxu0 0
      %2102 = vmatpush1.bf16.msra.mxu0 0
      %2103 = vmatprep.subr.bf16.mxu0 0
      %2104 = vmatpush1.bf16.msra.mxu0 0
      %2105 = vmatprep.subr.bf16.mxu0 0
      %2106 = vmatpush1.bf16.msra.mxu0 0
      %2107 = vmatprep.subr.bf16.mxu0 0
      %2108 = vmatpush1.bf16.msra.mxu0 0
      %2109 = vmatprep.subr.bf16.mxu0 0
      %2110 = vmatpush1.bf16.msra.mxu0 0
      %2111 = vmatprep.subr.bf16.mxu0 0
      %2112 = vmatpush1.bf16.msra.mxu0 0
      %2113 = vmatprep.subr.bf16.mxu0 0
      %2114 = vmatpush1.bf16.msra.mxu0 0
      %2115 = vmatprep.subr.bf16.mxu0 0
      %2116 = vmatpush1.bf16.msra.mxu0 0
      %2117 = vmatprep.subr.bf16.mxu0 0
      %2118 = vmatpush1.bf16.msra.mxu0 0
      %2119 = vmatprep.subr.bf16.mxu0 0
      %2120 = vmatpush1.bf16.msra.mxu0 0
      %2121 = vmatprep.subr.bf16.mxu0 0
      %2122 = vmatpush1.bf16.msra.mxu0 0
      %2123 = vmatprep.subr.bf16.mxu0 0
      %2124 = vmatpush1.bf16.msra.mxu0 0
      %2125 = vmatprep.subr.bf16.mxu0 0
      %2126 = vmatpush1.bf16.msra.mxu0 0
      %2127 = vmatprep.mubr.bf16.mxu0 0
      %2128 = vmatmul.mubr.bf16.gmra.mrb[0].mxu0 %v1627
      %v2129 = vpop.f32.mrb[0].mxu0
      %v2130 = vadd.f32 %v1608, %v2129
      %v2131 = vpop.f32.mrb[0].mxu0
      %v2132 = vpop.f32.mrb[0].mxu0
      %v2133 = vpop.f32.mrb[0].mxu0
      %2134 = vdwg.mxu0
      %s2135 = scalar_lea.vmem %s226, 56
      %2136 = vst.msk [vmem:[%s2135] sm:$0xff] %vm1673, %v2130
      %s2137 = scalar_lea.vmem [#allocation2], 160
      %v2138 = vld [vmem:[%s2137] sm:$0xf]
      %v2139 = vld [vmem:[%s2137 + $0x4] sm:$0xf]
      %v2140 = vld [vmem:[%s2137 + $0x8] sm:$0xf]
      %v2141 = vld [vmem:[%s2137 + $0xc] sm:$0xf]
      %v2142 = vld [vmem:[%s2137 + $0x10] sm:$0x3]
      %v2148 = vunpack.c.l.b16 %v2138
      %v2149 = vunpack.c.l.b16 %v2139
      %v2150 = vunpack.c.l.b16 %v2140
      %v2151 = vunpack.c.l.b16 %v2141
      %v2152 = vunpack.c.l.b16 %v2142
      %v2153 = vpack.c.b16 %v2149, %v2148
      %v2154 = vpack.c.b16 %v2151, %v2150
      %v2155 = vpack.c.b16 %v2152, %v2152
      %v2159 = vsel %vm1629, %v2155, 0
      %2161 = vmatprep.subr.bf16.mxu0 0
      %2162 = vmatpush1.bf16.msra.mxu0 %v2153
      %2163 = vmatprep.subr.bf16.mxu0 0
      %2164 = vmatpush1.bf16.msra.mxu0 %v2154
      %2165 = vmatprep.subr.bf16.mxu0 0
      %2166 = vmatpush1.bf16.msra.mxu0 %v2159
      %2167 = vmatprep.subr.bf16.mxu0 0
      %2168 = vmatpush1.bf16.msra.mxu0 0
      %2169 = vmatprep.subr.bf16.mxu0 0
      %2170 = vmatpush1.bf16.msra.mxu0 0
      %2171 = vmatprep.subr.bf16.mxu0 0
      %2172 = vmatpush1.bf16.msra.mxu0 0
      %2173 = vmatprep.subr.bf16.mxu0 0
      %2174 = vmatpush1.bf16.msra.mxu0 0
      %2175 = vmatprep.subr.bf16.mxu0 0
      %2176 = vmatpush1.bf16.msra.mxu0 0
      %2177 = vmatprep.subr.bf16.mxu0 0
      %2178 = vmatpush1.bf16.msra.mxu0 0
      %2179 = vmatprep.subr.bf16.mxu0 0
      %2180 = vmatpush1.bf16.msra.mxu0 0
      %2181 = vmatprep.subr.bf16.mxu0 0
      %2182 = vmatpush1.bf16.msra.mxu0 0
      %2183 = vmatprep.subr.bf16.mxu0 0
      %2184 = vmatpush1.bf16.msra.mxu0 0
      %2185 = vmatprep.subr.bf16.mxu0 0
      %2186 = vmatpush1.bf16.msra.mxu0 0
      %2187 = vmatprep.subr.bf16.mxu0 0
      %2188 = vmatpush1.bf16.msra.mxu0 0
      %2189 = vmatprep.subr.bf16.mxu0 0
      %2190 = vmatpush1.bf16.msra.mxu0 0
      %2191 = vmatprep.subr.bf16.mxu0 0
      %2192 = vmatpush1.bf16.msra.mxu0 0
      %2193 = vmatprep.mubr.bf16.mxu0 0
      %2194 = vmatmul.mubr.bf16.gmra.mrb[0].mxu0 %v1627
      %v2195 = vpop.f32.mrb[0].mxu0
      %v2196 = vadd.f32 %v1608, %v2195
      %v2197 = vpop.f32.mrb[0].mxu0
      %v2198 = vpop.f32.mrb[0].mxu0
      %v2199 = vpop.f32.mrb[0].mxu0
      %2200 = vdwg.mxu0
      %s2201 = scalar_lea.vmem %s226, 64
      %2202 = vst.msk [vmem:[%s2201] sm:$0xff] %vm1673, %v2196
      %s2203 = scalar_lea.vmem [#allocation2], 180
      %v2204 = vld [vmem:[%s2203] sm:$0xf]
      %v2205 = vld [vmem:[%s2203 + $0x4] sm:$0xf]
      %v2206 = vld [vmem:[%s2203 + $0x8] sm:$0xf]
      %v2207 = vld [vmem:[%s2203 + $0xc] sm:$0xf]
      %v2208 = vld [vmem:[%s2203 + $0x10] sm:$0x3]
      %v2214 = vunpack.c.l.b16 %v2204
      %v2215 = vunpack.c.l.b16 %v2205
      %v2216 = vunpack.c.l.b16 %v2206
      %v2217 = vunpack.c.l.b16 %v2207
      %v2218 = vunpack.c.l.b16 %v2208
      %v2219 = vpack.c.b16 %v2215, %v2214
      %v2220 = vpack.c.b16 %v2217, %v2216
      %v2221 = vpack.c.b16 %v2218, %v2218
      %v2225 = vsel %vm1629, %v2221, 0
      %2227 = vmatprep.subr.bf16.mxu0 0
      %2228 = vmatpush1.bf16.msra.mxu0 %v2219
      %2229 = vmatprep.subr.bf16.mxu0 0
      %2230 = vmatpush1.bf16.msra.mxu0 %v2220
      %2231 = vmatprep.subr.bf16.mxu0 0
      %2232 = vmatpush1.bf16.msra.mxu0 %v2225
      %2233 = vmatprep.subr.bf16.mxu0 0
      %2234 = vmatpush1.bf16.msra.mxu0 0
      %2235 = vmatprep.subr.bf16.mxu0 0
      %2236 = vmatpush1.bf16.msra.mxu0 0
      %2237 = vmatprep.subr.bf16.mxu0 0
      %2238 = vmatpush1.bf16.msra.mxu0 0
      %2239 = vmatprep.subr.bf16.mxu0 0
      %2240 = vmatpush1.bf16.msra.mxu0 0
      %2241 = vmatprep.subr.bf16.mxu0 0
      %2242 = vmatpush1.bf16.msra.mxu0 0
      %2243 = vmatprep.subr.bf16.mxu0 0
      %2244 = vmatpush1.bf16.msra.mxu0 0
      %2245 = vmatprep.subr.bf16.mxu0 0
      %2246 = vmatpush1.bf16.msra.mxu0 0
      %2247 = vmatprep.subr.bf16.mxu0 0
      %2248 = vmatpush1.bf16.msra.mxu0 0
      %2249 = vmatprep.subr.bf16.mxu0 0
      %2250 = vmatpush1.bf16.msra.mxu0 0
      %2251 = vmatprep.subr.bf16.mxu0 0
      %2252 = vmatpush1.bf16.msra.mxu0 0
      %2253 = vmatprep.subr.bf16.mxu0 0
      %2254 = vmatpush1.bf16.msra.mxu0 0
      %2255 = vmatprep.subr.bf16.mxu0 0
      %2256 = vmatpush1.bf16.msra.mxu0 0
      %2257 = vmatprep.subr.bf16.mxu0 0
      %2258 = vmatpush1.bf16.msra.mxu0 0
      %2259 = vmatprep.mubr.bf16.mxu0 0
      %2260 = vmatmul.mubr.bf16.gmra.mrb[0].mxu0 %v1627
      %v2261 = vpop.f32.mrb[0].mxu0
      %v2262 = vadd.f32 %v1608, %v2261
      %v2263 = vpop.f32.mrb[0].mxu0
      %v2264 = vpop.f32.mrb[0].mxu0
      %v2265 = vpop.f32.mrb[0].mxu0
      %2266 = vdwg.mxu0
      %s2267 = scalar_lea.vmem %s226, 72
      %2268 = vst.msk [vmem:[%s2267] sm:$0xff] %vm1673, %v2262
      %s2269 = scalar_lea.vmem [#allocation2], 200
      %v2270 = vld [vmem:[%s2269] sm:$0xf]
      %v2271 = vld [vmem:[%s2269 + $0x4] sm:$0xf]
      %v2272 = vld [vmem:[%s2269 + $0x8] sm:$0xf]
      %v2273 = vld [vmem:[%s2269 + $0xc] sm:$0xf]
      %v2274 = vld [vmem:[%s2269 + $0x10] sm:$0x3]
      %v2280 = vunpack.c.l.b16 %v2270
      %v2281 = vunpack.c.l.b16 %v2271
      %v2282 = vunpack.c.l.b16 %v2272
      %v2283 = vunpack.c.l.b16 %v2273
      %v2284 = vunpack.c.l.b16 %v2274
      %v2285 = vpack.c.b16 %v2281, %v2280
      %v2286 = vpack.c.b16 %v2283, %v2282
      %v2287 = vpack.c.b16 %v2284, %v2284
      %v2291 = vsel %vm1629, %v2287, 0
      %2293 = vmatprep.subr.bf16.mxu0 0
      %2294 = vmatpush1.bf16.msra.mxu0 %v2285
      %2295 = vmatprep.subr.bf16.mxu0 0
      %2296 = vmatpush1.bf16.msra.mxu0 %v2286
      %2297 = vmatprep.subr.bf16.mxu0 0
      %2298 = vmatpush1.bf16.msra.mxu0 %v2291
      %2299 = vmatprep.subr.bf16.mxu0 0
      %2300 = vmatpush1.bf16.msra.mxu0 0
      %2301 = vmatprep.subr.bf16.mxu0 0
      %2302 = vmatpush1.bf16.msra.mxu0 0
      %2303 = vmatprep.subr.bf16.mxu0 0
      %2304 = vmatpush1.bf16.msra.mxu0 0
      %2305 = vmatprep.subr.bf16.mxu0 0
      %2306 = vmatpush1.bf16.msra.mxu0 0
      %2307 = vmatprep.subr.bf16.mxu0 0
      %2308 = vmatpush1.bf16.msra.mxu0 0
      %2309 = vmatprep.subr.bf16.mxu0 0
      %2310 = vmatpush1.bf16.msra.mxu0 0
      %2311 = vmatprep.subr.bf16.mxu0 0
      %2312 = vmatpush1.bf16.msra.mxu0 0
      %2313 = vmatprep.subr.bf16.mxu0 0
      %2314 = vmatpush1.bf16.msra.mxu0 0
      %2315 = vmatprep.subr.bf16.mxu0 0
      %2316 = vmatpush1.bf16.msra.mxu0 0
      %2317 = vmatprep.subr.bf16.mxu0 0
      %2318 = vmatpush1.bf16.msra.mxu0 0
      %2319 = vmatprep.subr.bf16.mxu0 0
      %2320 = vmatpush1.bf16.msra.mxu0 0
      %2321 = vmatprep.subr.bf16.mxu0 0
      %2322 = vmatpush1.bf16.msra.mxu0 0
      %2323 = vmatprep.subr.bf16.mxu0 0
      %2324 = vmatpush1.bf16.msra.mxu0 0
      %2325 = vmatprep.mubr.bf16.mxu0 0
      %2326 = vmatmul.mubr.bf16.gmra.mrb[0].mxu0 %v1627
      %v2327 = vpop.f32.mrb[0].mxu0
      %v2328 = vadd.f32 %v1608, %v2327
      %v2329 = vpop.f32.mrb[0].mxu0
      %v2330 = vpop.f32.mrb[0].mxu0
      %v2331 = vpop.f32.mrb[0].mxu0
      %2332 = vdwg.mxu0
      %s2333 = scalar_lea.vmem %s226, 80
      %2334 = vst.msk [vmem:[%s2333] sm:$0xff] %vm1673, %v2328
      %s2335 = scalar_lea.vmem [#allocation2], 220
      %v2336 = vld [vmem:[%s2335] sm:$0xf]
      %v2337 = vld [vmem:[%s2335 + $0x4] sm:$0xf]
      %v2338 = vld [vmem:[%s2335 + $0x8] sm:$0xf]
      %v2339 = vld [vmem:[%s2335 + $0xc] sm:$0xf]
      %v2340 = vld [vmem:[%s2335 + $0x10] sm:$0x3]
      %v2346 = vunpack.c.l.b16 %v2336
      %v2347 = vunpack.c.l.b16 %v2337
      %v2348 = vunpack.c.l.b16 %v2338
      %v2349 = vunpack.c.l.b16 %v2339
      %v2350 = vunpack.c.l.b16 %v2340
      %v2351 = vpack.c.b16 %v2347, %v2346
      %v2352 = vpack.c.b16 %v2349, %v2348
      %v2353 = vpack.c.b16 %v2350, %v2350
      %v2357 = vsel %vm1629, %v2353, 0
      %2359 = vmatprep.subr.bf16.mxu0 0
      %2360 = vmatpush1.bf16.msra.mxu0 %v2351
      %2361 = vmatprep.subr.bf16.mxu0 0
      %2362 = vmatpush1.bf16.msra.mxu0 %v2352
      %2363 = vmatprep.subr.bf16.mxu0 0
      %2364 = vmatpush1.bf16.msra.mxu0 %v2357
      %2365 = vmatprep.subr.bf16.mxu0 0
      %2366 = vmatpush1.bf16.msra.mxu0 0
      %2367 = vmatprep.subr.bf16.mxu0 0
      %2368 = vmatpush1.bf16.msra.mxu0 0
      %2369 = vmatprep.subr.bf16.mxu0 0
      %2370 = vmatpush1.bf16.msra.mxu0 0
      %2371 = vmatprep.subr.bf16.mxu0 0
      %2372 = vmatpush1.bf16.msra.mxu0 0
      %2373 = vmatprep.subr.bf16.mxu0 0
      %2374 = vmatpush1.bf16.msra.mxu0 0
      %2375 = vmatprep.subr.bf16.mxu0 0
      %2376 = vmatpush1.bf16.msra.mxu0 0
      %2377 = vmatprep.subr.bf16.mxu0 0
      %2378 = vmatpush1.bf16.msra.mxu0 0
      %2379 = vmatprep.subr.bf16.mxu0 0
      %2380 = vmatpush1.bf16.msra.mxu0 0
      %2381 = vmatprep.subr.bf16.mxu0 0
      %2382 = vmatpush1.bf16.msra.mxu0 0
      %2383 = vmatprep.subr.bf16.mxu0 0
      %2384 = vmatpush1.bf16.msra.mxu0 0
      %2385 = vmatprep.subr.bf16.mxu0 0
      %2386 = vmatpush1.bf16.msra.mxu0 0
      %2387 = vmatprep.subr.bf16.mxu0 0
      %2388 = vmatpush1.bf16.msra.mxu0 0
      %2389 = vmatprep.subr.bf16.mxu0 0
      %2390 = vmatpush1.bf16.msra.mxu0 0
      %2391 = vmatprep.mubr.bf16.mxu0 0
      %2392 = vmatmul.mubr.bf16.gmra.mrb[0].mxu0 %v1627
      %v2393 = vpop.f32.mrb[0].mxu0
      %v2394 = vadd.f32 %v1608, %v2393
      %v2395 = vpop.f32.mrb[0].mxu0
      %v2396 = vpop.f32.mrb[0].mxu0
      %v2397 = vpop.f32.mrb[0].mxu0
      %2398 = vdwg.mxu0
      %s2399 = scalar_lea.vmem %s226, 88
      %2400 = vst.msk [vmem:[%s2399] sm:$0xff] %vm1673, %v2394
      %s2401 = scalar_lea.vmem [#allocation2], 240
      %v2402 = vld [vmem:[%s2401] sm:$0xf]
      %v2403 = vld [vmem:[%s2401 + $0x4] sm:$0xf]
      %v2404 = vld [vmem:[%s2401 + $0x8] sm:$0xf]
      %v2405 = vld [vmem:[%s2401 + $0xc] sm:$0xf]
      %v2406 = vld [vmem:[%s2401 + $0x10] sm:$0x3]
      %v2412 = vunpack.c.l.b16 %v2402
      %v2413 = vunpack.c.l.b16 %v2403
      %v2414 = vunpack.c.l.b16 %v2404
      %v2415 = vunpack.c.l.b16 %v2405
      %v2416 = vunpack.c.l.b16 %v2406
      %v2417 = vpack.c.b16 %v2413, %v2412
      %v2418 = vpack.c.b16 %v2415, %v2414
      %v2419 = vpack.c.b16 %v2416, %v2416
      %v2423 = vsel %vm1629, %v2419, 0
      %2425 = vmatprep.subr.bf16.mxu0 0
      %2426 = vmatpush1.bf16.msra.mxu0 %v2417
      %2427 = vmatprep.subr.bf16.mxu0 0
      %2428 = vmatpush1.bf16.msra.mxu0 %v2418
      %2429 = vmatprep.subr.bf16.mxu0 0
      %2430 = vmatpush1.bf16.msra.mxu0 %v2423
      %2431 = vmatprep.subr.bf16.mxu0 0
      %2432 = vmatpush1.bf16.msra.mxu0 0
      %2433 = vmatprep.subr.bf16.mxu0 0
      %2434 = vmatpush1.bf16.msra.mxu0 0
      %2435 = vmatprep.subr.bf16.mxu0 0
      %2436 = vmatpush1.bf16.msra.mxu0 0
      %2437 = vmatprep.subr.bf16.mxu0 0
      %2438 = vmatpush1.bf16.msra.mxu0 0
      %2439 = vmatprep.subr.bf16.mxu0 0
      %2440 = vmatpush1.bf16.msra.mxu0 0
      %2441 = vmatprep.subr.bf16.mxu0 0
      %2442 = vmatpush1.bf16.msra.mxu0 0
      %2443 = vmatprep.subr.bf16.mxu0 0
      %2444 = vmatpush1.bf16.msra.mxu0 0
      %2445 = vmatprep.subr.bf16.mxu0 0
      %2446 = vmatpush1.bf16.msra.mxu0 0
      %2447 = vmatprep.subr.bf16.mxu0 0
      %2448 = vmatpush1.bf16.msra.mxu0 0
      %2449 = vmatprep.subr.bf16.mxu0 0
      %2450 = vmatpush1.bf16.msra.mxu0 0
      %2451 = vmatprep.subr.bf16.mxu0 0
      %2452 = vmatpush1.bf16.msra.mxu0 0
      %2453 = vmatprep.subr.bf16.mxu0 0
      %2454 = vmatpush1.bf16.msra.mxu0 0
      %2455 = vmatprep.subr.bf16.mxu0 0
      %2456 = vmatpush1.bf16.msra.mxu0 0
      %2457 = vmatprep.mubr.bf16.mxu0 0
      %2458 = vmatmul.mubr.bf16.gmra.mrb[0].mxu0 %v1627
      %v2459 = vpop.f32.mrb[0].mxu0
      %v2460 = vadd.f32 %v1608, %v2459
      %v2461 = vpop.f32.mrb[0].mxu0
      %v2462 = vpop.f32.mrb[0].mxu0
      %v2463 = vpop.f32.mrb[0].mxu0
      %2464 = vdwg.mxu0
      %s2465 = scalar_lea.vmem %s226, 96
      %2466 = vst.msk [vmem:[%s2465] sm:$0xff] %vm1673, %v2460
      %s2467 = scalar_lea.vmem [#allocation2], 260
      %v2468 = vld [vmem:[%s2467] sm:$0xf]
      %v2469 = vld [vmem:[%s2467 + $0x4] sm:$0xf]
      %v2470 = vld [vmem:[%s2467 + $0x8] sm:$0xf]
      %v2471 = vld [vmem:[%s2467 + $0xc] sm:$0xf]
      %v2472 = vld [vmem:[%s2467 + $0x10] sm:$0x3]
      %v2478 = vunpack.c.l.b16 %v2468
      %v2479 = vunpack.c.l.b16 %v2469
      %v2480 = vunpack.c.l.b16 %v2470
      %v2481 = vunpack.c.l.b16 %v2471
      %v2482 = vunpack.c.l.b16 %v2472
      %v2483 = vpack.c.b16 %v2479, %v2478
      %v2484 = vpack.c.b16 %v2481, %v2480
      %v2485 = vpack.c.b16 %v2482, %v2482
      %v2489 = vsel %vm1629, %v2485, 0
      %2491 = vmatprep.subr.bf16.mxu0 0
      %2492 = vmatpush1.bf16.msra.mxu0 %v2483
      %2493 = vmatprep.subr.bf16.mxu0 0
      %2494 = vmatpush1.bf16.msra.mxu0 %v2484
      %2495 = vmatprep.subr.bf16.mxu0 0
      %2496 = vmatpush1.bf16.msra.mxu0 %v2489
      %2497 = vmatprep.subr.bf16.mxu0 0
      %2498 = vmatpush1.bf16.msra.mxu0 0
      %2499 = vmatprep.subr.bf16.mxu0 0
      %2500 = vmatpush1.bf16.msra.mxu0 0
      %2501 = vmatprep.subr.bf16.mxu0 0
      %2502 = vmatpush1.bf16.msra.mxu0 0
      %2503 = vmatprep.subr.bf16.mxu0 0
      %2504 = vmatpush1.bf16.msra.mxu0 0
      %2505 = vmatprep.subr.bf16.mxu0 0
      %2506 = vmatpush1.bf16.msra.mxu0 0
      %2507 = vmatprep.subr.bf16.mxu0 0
      %2508 = vmatpush1.bf16.msra.mxu0 0
      %2509 = vmatprep.subr.bf16.mxu0 0
      %2510 = vmatpush1.bf16.msra.mxu0 0
      %2511 = vmatprep.subr.bf16.mxu0 0
      %2512 = vmatpush1.bf16.msra.mxu0 0
      %2513 = vmatprep.subr.bf16.mxu0 0
      %2514 = vmatpush1.bf16.msra.mxu0 0
      %2515 = vmatprep.subr.bf16.mxu0 0
      %2516 = vmatpush1.bf16.msra.mxu0 0
      %2517 = vmatprep.subr.bf16.mxu0 0
      %2518 = vmatpush1.bf16.msra.mxu0 0
      %2519 = vmatprep.subr.bf16.mxu0 0
      %2520 = vmatpush1.bf16.msra.mxu0 0
      %2521 = vmatprep.subr.bf16.mxu0 0
      %2522 = vmatpush1.bf16.msra.mxu0 0
      %2523 = vmatprep.mubr.bf16.mxu0 0
      %2524 = vmatmul.mubr.bf16.gmra.mrb[0].mxu0 %v1627
      %v2525 = vpop.f32.mrb[0].mxu0
      %v2526 = vadd.f32 %v1608, %v2525
      %v2527 = vpop.f32.mrb[0].mxu0
      %v2528 = vpop.f32.mrb[0].mxu0
      %v2529 = vpop.f32.mrb[0].mxu0
      %2530 = vdwg.mxu0
      %s2531 = scalar_lea.vmem %s226, 104
      %2532 = vst.msk [vmem:[%s2531] sm:$0xff] %vm1673, %v2526
      %s2533 = smul.u32 14, %s19
      %p2534 = scmp.lt.s32.totalorder %s18, 1
      %s2535 = scalar_select %p2534, %s18, 1
      %p2536 = scmp.lt.s32.totalorder %s2533, 13
      %s2537 = scalar_select %p2536, %s2533, 13
      %s2538 = smul.addr %s2535, 14
      %s2539 = sadd.s32 %s2537, %s2538
      %s2540 = smul.addr %s2539, 8
      %s2541 = scalar_lea.vmem %s3, %s2540
      // Predicated region
      $region33: #{adap_cnn_forward.1} parent=31 // pred_check
        %p2542 = pneg %p124
      $region34: #{adap_cnn_forward.1} parent=31 // pred_check_branch
        %2544 = sbr.rel (%p2542) target = $region36
      $region35: #{adap_cnn_forward.1} parent=31 // pred_region
        %s2545 = smul.u32 14, %s19
      $region36: #{adap_cnn_forward.1} parent=31 // pred_fallthru
        _
    $region32: #{adap_cnn_forward.1} parent=5 // pred_fallthru
      _
    %p2546 = scmp.le.s32.totalorder 2, %s9
    // Predicated region
    $region37: #{adap_cnn_forward.1} parent=5 // pred_check
      %p2547 = pneg %p2546
    $region38: #{adap_cnn_forward.1} parent=5 // pred_check_branch
      %2549 = sbr.rel (%p2547) target = $region40
    $region39: #{adap_cnn_forward.1} parent=5 // pred_region
      %s2550 = ssub.s32 %s9, 2
      // Predicated region
      $region41: #{adap_cnn_forward.1} parent=39 // pred_check
        %p2551 = pneg %p130
      $region42: #{adap_cnn_forward.1} parent=39 // pred_check_branch
        %2553 = sbr.rel (%p2551) target = $region44
      $region43: #{adap_cnn_forward.1} parent=39 // pred_region
        %s2554 = smul.u32 14, %s21
        %p2555 = scmp.lt.s32.totalorder %s20, 1
        %s2556 = scalar_select %p2555, %s20, 1
        %p2557 = scmp.lt.s32.totalorder %s2554, 13
        %s2558 = scalar_select %p2557, %s2554, 13
        %s2559 = smul.addr %s2556, 14
        %s2560 = sadd.s32 %s2558, %s2559
        %s2561 = smul.addr %s2560, 8
        %s2562 = scalar_lea.vmem %s3, %s2561
      $region44: #{adap_cnn_forward.1} parent=39 // pred_fallthru
        _
    $region40: #{adap_cnn_forward.1} parent=5 // pred_fallthru
      _
  $region6: #{adap_cnn_forward.1} parent=0 // loop_footer
    %s13 = sadd.s32 1, %s9
  $region7: #{adap_cnn_forward.1} parent=0 // loop_footer_branch
    %8 = sbr.rel target = $region3
  $region8: #{adap_cnn_forward.1} parent=0 // loop_exit
    _

</llo_original>
